<compile_context>
chip_gen: v7x
topology: tpu7x:2x2x1
jax: 0.10.0
libtpu: 0.0.40
codegen_flags: <defaults>
</compile_context>

<pallas_src>
import functools
import math

import jax
import jax.numpy as jnp
from jax.experimental import pallas as pl
from jax.experimental.pallas import tpu as pltpu


def encoder_stack_kernel(x_ref,
                         wq_ref, bq_ref, wk_ref, bk_ref, wv_ref, bv_ref,
                         wo_ref, bo_ref,
                         g1_ref, be1_ref,
                         w1_ref, bf1_ref, w2_ref, bf2_ref,
                         g2_ref, be2_ref,
                         o_ref, h_ref, *, nheads, eps):
    layer = pl.program_id(1)

    # Layer 0: load this batch block's activations into the VMEM carry.
    @pl.when(layer == 0)
    def _():
        h_ref[...] = x_ref[0].astype(jnp.float32)

    x = h_ref[...]                                # (S, D) f32 carry
    S, D = x.shape
    dh = D // nheads
    scale = 1.0 / math.sqrt(dh)

    xb = x.astype(jnp.bfloat16)

    # --- QKV projections: bf16 MXU, f32 accumulate ---
    q = jnp.dot(xb, wq_ref[0], preferred_element_type=jnp.float32) + bq_ref[0]
    k = jnp.dot(xb, wk_ref[0], preferred_element_type=jnp.float32) + bk_ref[0]
    v = jnp.dot(xb, wv_ref[0], preferred_element_type=jnp.float32) + bv_ref[0]

    # Fold 1/sqrt(dh) into q once (cheaper than scaling the S x S scores).
    q = q * scale

    # (S, D) -> (H, S, dh): one batched attention instead of per-head loops.
    q3 = jnp.swapaxes(q.reshape(S, nheads, dh), 0, 1).astype(jnp.bfloat16)
    k3 = jnp.swapaxes(k.reshape(S, nheads, dh), 0, 1).astype(jnp.bfloat16)
    v3 = jnp.swapaxes(v.reshape(S, nheads, dh), 0, 1).astype(jnp.bfloat16)

    s = jnp.einsum('hqd,hkd->hqk', q3, k3,
                   preferred_element_type=jnp.float32)        # (H, S, S) f32
    s = s - jnp.max(s, axis=-1, keepdims=True)
    p = jnp.exp(s)
    p = p * pl.reciprocal(jnp.sum(p, axis=-1, keepdims=True), approx=True)
    ctx = jnp.einsum('hqk,hkd->hqd', p.astype(jnp.bfloat16), v3,
                     preferred_element_type=jnp.float32)      # (H, S, dh)
    attn = jnp.swapaxes(ctx, 0, 1).reshape(S, D)

    attn = jnp.dot(attn.astype(jnp.bfloat16), wo_ref[0],
                   preferred_element_type=jnp.float32) + bo_ref[0]

    # --- residual + LayerNorm 1 (f32) ---
    y = x + attn
    mu = jnp.mean(y, axis=-1, keepdims=True)
    var = jnp.mean((y - mu) ** 2, axis=-1, keepdims=True)
    y = (y - mu) * jax.lax.rsqrt(var + eps) * g1_ref[0] + be1_ref[0]

    # --- feed-forward (relu): bf16 MXU, f32 accumulate/elementwise ---
    h1 = jnp.dot(y.astype(jnp.bfloat16), w1_ref[0],
                 preferred_element_type=jnp.float32) + bf1_ref[0]
    h1 = jnp.maximum(h1, 0.0)
    h2 = jnp.dot(h1.astype(jnp.bfloat16), w2_ref[0],
                 preferred_element_type=jnp.float32) + bf2_ref[0]

    # --- residual + LayerNorm 2 (f32) ---
    z = y + h2
    mu2 = jnp.mean(z, axis=-1, keepdims=True)
    var2 = jnp.mean((z - mu2) ** 2, axis=-1, keepdims=True)
    z = (z - mu2) * jax.lax.rsqrt(var2 + eps) * g2_ref[0] + be2_ref[0]

    h_ref[...] = z                                # carry to next layer (VMEM)

    # Only the final layer's activations are written back to HBM.
    @pl.when(layer == pl.num_programs(1) - 1)
    def _():
        o_ref[0] = z.astype(o_ref.dtype)


def transformer_encoder(x, params, *, nheads, eps):
    """x: (B, S, D); params: tuple of layer-stacked arrays (leading dim L)."""
    B, S, D = x.shape
    L = params[0].shape[0]
    assert D % nheads == 0

    kernel = functools.partial(encoder_stack_kernel, nheads=nheads, eps=eps)

    in_specs = [pl.BlockSpec((1, S, D), lambda b, l: (b, 0, 0))]
    for p in params:
        nz = p.ndim - 1
        in_specs.append(
            pl.BlockSpec((1,) + p.shape[1:],
                         lambda b, l, nz=nz: (l,) + (0,) * nz))

    # TODO(synk): for large D/F (e.g. the module defaults D=256, F=1024 at real
    # sequence lengths) add an F-tile grid axis and a KV-tile (flash) axis plus
    # vmem_limit_bytes so weights/scores stay within v7x's 64 MiB VMEM.
    return pl.pallas_call(
        kernel,
        out_shape=jax.ShapeDtypeStruct((B, S, D), x.dtype),
        grid=(B, L),                     # layer axis last: sequential carry
        in_specs=in_specs,
        out_specs=pl.BlockSpec((1, S, D), lambda b, l: (b, 0, 0)),
        scratch_shapes=[pltpu.VMEM((S, D), jnp.float32)],
        compiler_params=pltpu.CompilerParams(
            dimension_semantics=("parallel", "arbitrary")),
    )(x, *params)


def init_params(key, num_layers, D, F):
    """Deterministic params for the whole stack, layer-stacked along axis 0.

    Weights are stored as (in, out) and in bf16 (MXU operands); biases and
    LayerNorm affine params stay f32.
    """
    sd = 1.0 / math.sqrt(D)
    sf = 1.0 / math.sqrt(F)
    wq, wk, wv, wo, w1, w2 = [], [], [], [], [], []
    for k in jax.random.split(key, num_layers):
        ks = jax.random.split(k, 6)
        wq.append(jax.random.uniform(ks[0], (D, D), jnp.float32, -sd, sd))
        wk.append(jax.random.uniform(ks[1], (D, D), jnp.float32, -sd, sd))
        wv.append(jax.random.uniform(ks[2], (D, D), jnp.float32, -sd, sd))
        wo.append(jax.random.uniform(ks[3], (D, D), jnp.float32, -sd, sd))
        w1.append(jax.random.uniform(ks[4], (D, F), jnp.float32, -sd, sd))
        w2.append(jax.random.uniform(ks[5], (F, D), jnp.float32, -sf, sf))

    stack_bf16 = lambda ws: jnp.stack(ws).astype(jnp.bfloat16)
    zeros_d = jnp.zeros((num_layers, 1, D), jnp.float32)
    zeros_f = jnp.zeros((num_layers, 1, F), jnp.float32)
    ones_d = jnp.ones((num_layers, 1, D), jnp.float32)

    # Order must match the kernel signature.
    return (stack_bf16(wq), zeros_d,
            stack_bf16(wk), zeros_d,
            stack_bf16(wv), zeros_d,
            stack_bf16(wo), zeros_d,
            ones_d, zeros_d,             # LayerNorm 1 gamma/beta
            stack_bf16(w1), zeros_f,     # FFN in
            stack_bf16(w2), zeros_d,     # FFN out
            ones_d, zeros_d)             # LayerNorm 2 gamma/beta


if __name__ == "__main__":
    # Small, lane-aligned configuration consistent with the module's forward
    # (module defaults: D=256, H=8, L=6, F=1024; scaled down but D,F kept as
    #  multiples of 128 so every tile is lane-dense).
    batch = 2
    seq = 8
    dimension = 128
    nheads = 4
    num_encoder_layers = 2
    dim_feedforward = 256
    layer_norm_eps = 1e-5

    key = jax.random.PRNGKey(0)
    key_x, key_p = jax.random.split(key)
    x = jax.random.normal(key_x, (batch, seq, dimension), jnp.float32)

    params = init_params(key_p, num_encoder_layers, dimension, dim_feedforward)

    out = transformer_encoder(x, params, nheads=nheads, eps=layer_norm_eps)
    out = jax.block_until_ready(out)
    assert out.shape == (batch, seq, dimension)
    assert jnp.all(jnp.isfinite(out))
    print("KERNEL_OK")
</pallas_src>

<mosaic_0001>
module attributes {stable_mosaic.version = 11 : i64} {
  func.func @encoder_stack_kernel(%arg0: i32, %arg1: i32, %arg2: memref<1x8x128xf32, #tpu.memory_space<vmem>>, %arg3: memref<1x128x128xbf16, #tpu.memory_space<vmem>>, %arg4: memref<1x1x128xf32, #tpu.memory_space<vmem>>, %arg5: memref<1x128x128xbf16, #tpu.memory_space<vmem>>, %arg6: memref<1x1x128xf32, #tpu.memory_space<vmem>>, %arg7: memref<1x128x128xbf16, #tpu.memory_space<vmem>>, %arg8: memref<1x1x128xf32, #tpu.memory_space<vmem>>, %arg9: memref<1x128x128xbf16, #tpu.memory_space<vmem>>, %arg10: memref<1x1x128xf32, #tpu.memory_space<vmem>>, %arg11: memref<1x1x128xf32, #tpu.memory_space<vmem>>, %arg12: memref<1x1x128xf32, #tpu.memory_space<vmem>>, %arg13: memref<1x128x256xbf16, #tpu.memory_space<vmem>>, %arg14: memref<1x1x256xf32, #tpu.memory_space<vmem>>, %arg15: memref<1x256x128xbf16, #tpu.memory_space<vmem>>, %arg16: memref<1x1x128xf32, #tpu.memory_space<vmem>>, %arg17: memref<1x1x128xf32, #tpu.memory_space<vmem>>, %arg18: memref<1x1x128xf32, #tpu.memory_space<vmem>>, %arg19: memref<1x8x128xf32, #tpu.memory_space<vmem>>, %arg20: memref<8x128xf32, #tpu.memory_space<vmem>>) attributes {dimension_semantics = [#tpu.dimension_semantics<parallel>, #tpu.dimension_semantics<arbitrary>], iteration_bounds = array<i64: 2, 2>, scalar_prefetch = 0 : i64, scratch_operands = 1 : i64, tpu.core_type = #tpu.core_type<tc>, window_params = [{transform_indices = @transform_0, window_bounds = array<i64: 1, 8, 128>}, {transform_indices = @transform_1, window_bounds = array<i64: 1, 128, 128>}, {transform_indices = @transform_2, window_bounds = array<i64: 1, 1, 128>}, {transform_indices = @transform_3, window_bounds = array<i64: 1, 128, 128>}, {transform_indices = @transform_4, window_bounds = array<i64: 1, 1, 128>}, {transform_indices = @transform_5, window_bounds = array<i64: 1, 128, 128>}, {transform_indices = @transform_6, window_bounds = array<i64: 1, 1, 128>}, {transform_indices = @transform_7, window_bounds = array<i64: 1, 128, 128>}, {transform_indices = @transform_8, window_bounds = array<i64: 1, 1, 128>}, {transform_indices = @transform_9, window_bounds = array<i64: 1, 1, 128>}, {transform_indices = @transform_10, window_bounds = array<i64: 1, 1, 128>}, {transform_indices = @transform_11, window_bounds = array<i64: 1, 128, 256>}, {transform_indices = @transform_12, window_bounds = array<i64: 1, 1, 256>}, {transform_indices = @transform_13, window_bounds = array<i64: 1, 256, 128>}, {transform_indices = @transform_14, window_bounds = array<i64: 1, 1, 128>}, {transform_indices = @transform_15, window_bounds = array<i64: 1, 1, 128>}, {transform_indices = @transform_16, window_bounds = array<i64: 1, 1, 128>}, {transform_indices = @transform_17, window_bounds = array<i64: 1, 8, 128>}]} {
    %c0_i32 = arith.constant 0 : i32
    %0 = arith.cmpi eq, %arg1, %c0_i32 : i32
    %1 = arith.extui %0 : i1 to i32
    %c0_i32_0 = arith.constant 0 : i32
    %2 = arith.cmpi ne, %1, %c0_i32_0 : i32
    scf.if %2 {
      %c0_74 = arith.constant 0 : index
      %c0_75 = arith.constant 0 : index
      %c0_76 = arith.constant 0 : index
      %136 = vector.load %arg2[%c0_74, %c0_75, %c0_76] : memref<1x8x128xf32, #tpu.memory_space<vmem>>, vector<1x8x128xf32>
      %137 = vector.shape_cast %136 : vector<1x8x128xf32> to vector<8x128xf32>
      %c0_77 = arith.constant 0 : index
      %c0_78 = arith.constant 0 : index
      %138 = vector.load %arg20[%c0_77, %c0_78] : memref<8x128xf32, #tpu.memory_space<vmem>>, vector<8x128xf32>
      tpu.vector_store %arg20[%c0_77, %c0_78], %137 {strides = array<i32>} : memref<8x128xf32, #tpu.memory_space<vmem>>, vector<8x128xf32>,
    } else {
    }
    %c0 = arith.constant 0 : index
    %c0_1 = arith.constant 0 : index
    %3 = vector.load %arg20[%c0, %c0_1] : memref<8x128xf32, #tpu.memory_space<vmem>>, vector<8x128xf32>
    %4 = arith.truncf %3 : vector<8x128xf32> to vector<8x128xbf16>
    %c0_2 = arith.constant 0 : index
    %c0_3 = arith.constant 0 : index
    %c0_4 = arith.constant 0 : index
    %5 = vector.load %arg3[%c0_2, %c0_3, %c0_4] : memref<1x128x128xbf16, #tpu.memory_space<vmem>>, vector<1x128x128xbf16>
    %6 = vector.shape_cast %5 : vector<1x128x128xbf16> to vector<128x128xbf16>
    %cst = arith.constant dense<0.000000e+00> : vector<8x128xf32>
    %7 = tpu.matmul %4, %6, %cst {dimension_numbers = #tpu.dot_dimension_numbers<[1], [0], [0], [1], [0, 0, 1, 1], [], []>} : vector<8x128xbf16>, vector<128x128xbf16>, vector<8x128xf32> -> vector<8x128xf32>
    %c0_5 = arith.constant 0 : index
    %c0_6 = arith.constant 0 : index
    %c0_7 = arith.constant 0 : index
    %8 = vector.load %arg4[%c0_5, %c0_6, %c0_7] : memref<1x1x128xf32, #tpu.memory_space<vmem>>, vector<1x1x128xf32>
    %9 = vector.shape_cast %8 : vector<1x1x128xf32> to vector<1x128xf32>
    %10 = vector.broadcast %9 : vector<1x128xf32> to vector<8x128xf32>
    %11 = arith.addf %7, %10 : vector<8x128xf32>
    %c0_8 = arith.constant 0 : index
    %c0_9 = arith.constant 0 : index
    %c0_10 = arith.constant 0 : index
    %12 = vector.load %arg5[%c0_8, %c0_9, %c0_10] : memref<1x128x128xbf16, #tpu.memory_space<vmem>>, vector<1x128x128xbf16>
    %13 = vector.shape_cast %12 : vector<1x128x128xbf16> to vector<128x128xbf16>
    %cst_11 = arith.constant dense<0.000000e+00> : vector<8x128xf32>
    %14 = tpu.matmul %4, %13, %cst_11 {dimension_numbers = #tpu.dot_dimension_numbers<[1], [0], [0], [1], [0, 0, 1, 1], [], []>} : vector<8x128xbf16>, vector<128x128xbf16>, vector<8x128xf32> -> vector<8x128xf32>
    %c0_12 = arith.constant 0 : index
    %c0_13 = arith.constant 0 : index
    %c0_14 = arith.constant 0 : index
    %15 = vector.load %arg6[%c0_12, %c0_13, %c0_14] : memref<1x1x128xf32, #tpu.memory_space<vmem>>, vector<1x1x128xf32>
    %16 = vector.shape_cast %15 : vector<1x1x128xf32> to vector<1x128xf32>
    %17 = vector.broadcast %16 : vector<1x128xf32> to vector<8x128xf32>
    %18 = arith.addf %14, %17 : vector<8x128xf32>
    %c0_15 = arith.constant 0 : index
    %c0_16 = arith.constant 0 : index
    %c0_17 = arith.constant 0 : index
    %19 = vector.load %arg7[%c0_15, %c0_16, %c0_17] : memref<1x128x128xbf16, #tpu.memory_space<vmem>>, vector<1x128x128xbf16>
    %20 = vector.shape_cast %19 : vector<1x128x128xbf16> to vector<128x128xbf16>
    %cst_18 = arith.constant dense<0.000000e+00> : vector<8x128xf32>
    %21 = tpu.matmul %4, %20, %cst_18 {dimension_numbers = #tpu.dot_dimension_numbers<[1], [0], [0], [1], [0, 0, 1, 1], [], []>} : vector<8x128xbf16>, vector<128x128xbf16>, vector<8x128xf32> -> vector<8x128xf32>
    %c0_19 = arith.constant 0 : index
    %c0_20 = arith.constant 0 : index
    %c0_21 = arith.constant 0 : index
    %22 = vector.load %arg8[%c0_19, %c0_20, %c0_21] : memref<1x1x128xf32, #tpu.memory_space<vmem>>, vector<1x1x128xf32>
    %23 = vector.shape_cast %22 : vector<1x1x128xf32> to vector<1x128xf32>
    %24 = vector.broadcast %23 : vector<1x128xf32> to vector<8x128xf32>
    %25 = arith.addf %21, %24 : vector<8x128xf32>
    %cst_22 = arith.constant 0.176776692 : f32
    %26 = vector.broadcast %cst_22 : f32 to vector<8x128xf32>
    %27 = arith.mulf %11, %26 : vector<8x128xf32>
    %28 = vector.shape_cast %27 : vector<8x128xf32> to vector<8x4x32xf32>
    %29 = tpu.transpose %28, [1, 0, 2] : vector<8x4x32xf32> -> vector<4x8x32xf32>
    %30 = arith.truncf %29 : vector<4x8x32xf32> to vector<4x8x32xbf16>
    %31 = vector.shape_cast %18 : vector<8x128xf32> to vector<8x4x32xf32>
    %32 = tpu.transpose %31, [1, 0, 2] : vector<8x4x32xf32> -> vector<4x8x32xf32>
    %33 = arith.truncf %32 : vector<4x8x32xf32> to vector<4x8x32xbf16>
    %34 = vector.shape_cast %25 : vector<8x128xf32> to vector<8x4x32xf32>
    %35 = tpu.transpose %34, [1, 0, 2] : vector<8x4x32xf32> -> vector<4x8x32xf32>
    %36 = arith.truncf %35 : vector<4x8x32xf32> to vector<4x8x32xbf16>
    "tpu.trace_start"() <{level = 10 : i32, message = "hqd,hkd->hqk"}> : () -> ()
    %cst_23 = arith.constant dense<0.000000e+00> : vector<4x8x8xf32>
    %37 = tpu.matmul %30, %33, %cst_23 {dimension_numbers = #tpu.dot_dimension_numbers<[2], [2], [1], [1], [0, 0, 0, 1, 1, 1], [0], [0]>} : vector<4x8x32xbf16>, vector<4x8x32xbf16>, vector<4x8x8xf32> -> vector<4x8x8xf32>
    "tpu.trace_stop"() : () -> ()
    %cst_24 = arith.constant dense<0xFF800000> : vector<4x8xf32>
    %38 = vector.multi_reduction <maximumf>, %37, %cst_24 [2] : vector<4x8x8xf32> to vector<4x8xf32>
    %39 = vector.shape_cast %38 : vector<4x8xf32> to vector<4x8x1xf32>
    %40 = vector.broadcast %39 : vector<4x8x1xf32> to vector<4x8x8xf32>
    %41 = arith.subf %37, %40 : vector<4x8x8xf32>
    %42 = math.exp %41 : vector<4x8x8xf32>
    %cst_25 = arith.constant dense<0.000000e+00> : vector<4x8xf32>
    %43 = vector.multi_reduction <add>, %42, %cst_25 [2] : vector<4x8x8xf32> to vector<4x8xf32>
    %44 = vector.shape_cast %43 : vector<4x8xf32> to vector<4x8x1xf32>
    %45 = tpu.reciprocal %44 {approx = true} : vector<4x8x1xf32> -> vector<4x8x1xf32>
    %46 = vector.broadcast %45 : vector<4x8x1xf32> to vector<4x8x8xf32>
    %47 = arith.mulf %42, %46 : vector<4x8x8xf32>
    %48 = arith.truncf %47 : vector<4x8x8xf32> to vector<4x8x8xbf16>
    "tpu.trace_start"() <{level = 10 : i32, message = "hqk,hkd->hqd"}> : () -> ()
    %cst_26 = arith.constant dense<0.000000e+00> : vector<4x8x32xf32>
    %49 = tpu.matmul %48, %36, %cst_26 {dimension_numbers = #tpu.dot_dimension_numbers<[2], [1], [1], [2], [0, 0, 0, 1, 1, 2], [0], [0]>} : vector<4x8x8xbf16>, vector<4x8x32xbf16>, vector<4x8x32xf32> -> vector<4x8x32xf32>
    "tpu.trace_stop"() : () -> ()
    %50 = tpu.transpose %49, [1, 0, 2] : vector<4x8x32xf32> -> vector<8x4x32xf32>
    %51 = vector.shape_cast %50 : vector<8x4x32xf32> to vector<8x128xf32>
    %52 = arith.truncf %51 : vector<8x128xf32> to vector<8x128xbf16>
    %c0_27 = arith.constant 0 : index
    %c0_28 = arith.constant 0 : index
    %c0_29 = arith.constant 0 : index
    %53 = vector.load %arg9[%c0_27, %c0_28, %c0_29] : memref<1x128x128xbf16, #tpu.memory_space<vmem>>, vector<1x128x128xbf16>
    %54 = vector.shape_cast %53 : vector<1x128x128xbf16> to vector<128x128xbf16>
    %cst_30 = arith.constant dense<0.000000e+00> : vector<8x128xf32>
    %55 = tpu.matmul %52, %54, %cst_30 {dimension_numbers = #tpu.dot_dimension_numbers<[1], [0], [0], [1], [0, 0, 1, 1], [], []>} : vector<8x128xbf16>, vector<128x128xbf16>, vector<8x128xf32> -> vector<8x128xf32>
    %c0_31 = arith.constant 0 : index
    %c0_32 = arith.constant 0 : index
    %c0_33 = arith.constant 0 : index
    %56 = vector.load %arg10[%c0_31, %c0_32, %c0_33] : memref<1x1x128xf32, #tpu.memory_space<vmem>>, vector<1x1x128xf32>
    %57 = vector.shape_cast %56 : vector<1x1x128xf32> to vector<1x128xf32>
    %58 = vector.broadcast %57 : vector<1x128xf32> to vector<8x128xf32>
    %59 = arith.addf %55, %58 : vector<8x128xf32>
    %60 = arith.addf %3, %59 : vector<8x128xf32>
    %cst_34 = arith.constant dense<0.000000e+00> : vector<8xf32>
    %61 = vector.multi_reduction <add>, %60, %cst_34 [1] : vector<8x128xf32> to vector<8xf32>
    %62 = vector.shape_cast %61 : vector<8xf32> to vector<8x1xf32>
    %cst_35 = arith.constant 1.280000e+02 : f32
    %63 = vector.broadcast %cst_35 : f32 to vector<8x1xf32>
    %64 = arith.divf %62, %63 : vector<8x1xf32>
    %65 = vector.broadcast %64 : vector<8x1xf32> to vector<8x128xf32>
    %66 = arith.subf %60, %65 : vector<8x128xf32>
    %67 = arith.mulf %66, %66 : vector<8x128xf32>
    %cst_36 = arith.constant dense<0.000000e+00> : vector<8xf32>
    %68 = vector.multi_reduction <add>, %67, %cst_36 [1] : vector<8x128xf32> to vector<8xf32>
    %69 = vector.shape_cast %68 : vector<8xf32> to vector<8x1xf32>
    %cst_37 = arith.constant 1.280000e+02 : f32
    %70 = vector.broadcast %cst_37 : f32 to vector<8x1xf32>
    %71 = arith.divf %69, %70 : vector<8x1xf32>
    %72 = vector.broadcast %64 : vector<8x1xf32> to vector<8x128xf32>
    %73 = arith.subf %60, %72 : vector<8x128xf32>
    %cst_38 = arith.constant 9.99999974E-6 : f32
    %74 = vector.broadcast %cst_38 : f32 to vector<8x1xf32>
    %75 = arith.addf %71, %74 : vector<8x1xf32>
    %76 = math.rsqrt %75 : vector<8x1xf32>
    %77 = vector.broadcast %76 : vector<8x1xf32> to vector<8x128xf32>
    %78 = arith.mulf %73, %77 : vector<8x128xf32>
    %c0_39 = arith.constant 0 : index
    %c0_40 = arith.constant 0 : index
    %c0_41 = arith.constant 0 : index
    %79 = vector.load %arg11[%c0_39, %c0_40, %c0_41] : memref<1x1x128xf32, #tpu.memory_space<vmem>>, vector<1x1x128xf32>
    %80 = vector.shape_cast %79 : vector<1x1x128xf32> to vector<1x128xf32>
    %81 = vector.broadcast %80 : vector<1x128xf32> to vector<8x128xf32>
    %82 = arith.mulf %78, %81 : vector<8x128xf32>
    %c0_42 = arith.constant 0 : index
    %c0_43 = arith.constant 0 : index
    %c0_44 = arith.constant 0 : index
    %83 = vector.load %arg12[%c0_42, %c0_43, %c0_44] : memref<1x1x128xf32, #tpu.memory_space<vmem>>, vector<1x1x128xf32>
    %84 = vector.shape_cast %83 : vector<1x1x128xf32> to vector<1x128xf32>
    %85 = vector.broadcast %84 : vector<1x128xf32> to vector<8x128xf32>
    %86 = arith.addf %82, %85 : vector<8x128xf32>
    %87 = arith.truncf %86 : vector<8x128xf32> to vector<8x128xbf16>
    %c0_45 = arith.constant 0 : index
    %c0_46 = arith.constant 0 : index
    %c0_47 = arith.constant 0 : index
    %88 = vector.load %arg13[%c0_45, %c0_46, %c0_47] : memref<1x128x256xbf16, #tpu.memory_space<vmem>>, vector<1x128x256xbf16>
    %89 = vector.shape_cast %88 : vector<1x128x256xbf16> to vector<128x256xbf16>
    %cst_48 = arith.constant dense<0.000000e+00> : vector<8x256xf32>
    %90 = tpu.matmul %87, %89, %cst_48 {dimension_numbers = #tpu.dot_dimension_numbers<[1], [0], [0], [1], [0, 0, 1, 1], [], []>} : vector<8x128xbf16>, vector<128x256xbf16>, vector<8x256xf32> -> vector<8x256xf32>
    %c0_49 = arith.constant 0 : index
    %c0_50 = arith.constant 0 : index
    %c0_51 = arith.constant 0 : index
    %91 = vector.load %arg14[%c0_49, %c0_50, %c0_51] : memref<1x1x256xf32, #tpu.memory_space<vmem>>, vector<1x1x256xf32>
    %92 = vector.shape_cast %91 : vector<1x1x256xf32> to vector<1x256xf32>
    %93 = vector.broadcast %92 : vector<1x256xf32> to vector<8x256xf32>
    %94 = arith.addf %90, %93 : vector<8x256xf32>
    %cst_52 = arith.constant 0.000000e+00 : f32
    %95 = vector.broadcast %cst_52 : f32 to vector<8x256xf32>
    %96 = arith.maximumf %94, %95 : vector<8x256xf32>
    %97 = arith.truncf %96 : vector<8x256xf32> to vector<8x256xbf16>
    %c0_53 = arith.constant 0 : index
    %c0_54 = arith.constant 0 : index
    %c0_55 = arith.constant 0 : index
    %98 = vector.load %arg15[%c0_53, %c0_54, %c0_55] : memref<1x256x128xbf16, #tpu.memory_space<vmem>>, vector<1x256x128xbf16>
    %99 = vector.shape_cast %98 : vector<1x256x128xbf16> to vector<256x128xbf16>
    %cst_56 = arith.constant dense<0.000000e+00> : vector<8x128xf32>
    %100 = tpu.matmul %97, %99, %cst_56 {dimension_numbers = #tpu.dot_dimension_numbers<[1], [0], [0], [1], [0, 0, 1, 1], [], []>} : vector<8x256xbf16>, vector<256x128xbf16>, vector<8x128xf32> -> vector<8x128xf32>
    %c0_57 = arith.constant 0 : index
    %c0_58 = arith.constant 0 : index
    %c0_59 = arith.constant 0 : index
    %101 = vector.load %arg16[%c0_57, %c0_58, %c0_59] : memref<1x1x128xf32, #tpu.memory_space<vmem>>, vector<1x1x128xf32>
    %102 = vector.shape_cast %101 : vector<1x1x128xf32> to vector<1x128xf32>
    %103 = vector.broadcast %102 : vector<1x128xf32> to vector<8x128xf32>
    %104 = arith.addf %100, %103 : vector<8x128xf32>
    %105 = arith.addf %86, %104 : vector<8x128xf32>
    %cst_60 = arith.constant dense<0.000000e+00> : vector<8xf32>
    %106 = vector.multi_reduction <add>, %105, %cst_60 [1] : vector<8x128xf32> to vector<8xf32>
    %107 = vector.shape_cast %106 : vector<8xf32> to vector<8x1xf32>
    %cst_61 = arith.constant 1.280000e+02 : f32
    %108 = vector.broadcast %cst_61 : f32 to vector<8x1xf32>
    %109 = arith.divf %107, %108 : vector<8x1xf32>
    %110 = vector.broadcast %109 : vector<8x1xf32> to vector<8x128xf32>
    %111 = arith.subf %105, %110 : vector<8x128xf32>
    %112 = arith.mulf %111, %111 : vector<8x128xf32>
    %cst_62 = arith.constant dense<0.000000e+00> : vector<8xf32>
    %113 = vector.multi_reduction <add>, %112, %cst_62 [1] : vector<8x128xf32> to vector<8xf32>
    %114 = vector.shape_cast %113 : vector<8xf32> to vector<8x1xf32>
    %cst_63 = arith.constant 1.280000e+02 : f32
    %115 = vector.broadcast %cst_63 : f32 to vector<8x1xf32>
    %116 = arith.divf %114, %115 : vector<8x1xf32>
    %117 = vector.broadcast %109 : vector<8x1xf32> to vector<8x128xf32>
    %118 = arith.subf %105, %117 : vector<8x128xf32>
    %cst_64 = arith.constant 9.99999974E-6 : f32
    %119 = vector.broadcast %cst_64 : f32 to vector<8x1xf32>
    %120 = arith.addf %116, %119 : vector<8x1xf32>
    %121 = math.rsqrt %120 : vector<8x1xf32>
    %122 = vector.broadcast %121 : vector<8x1xf32> to vector<8x128xf32>
    %123 = arith.mulf %118, %122 : vector<8x128xf32>
    %c0_65 = arith.constant 0 : index
    %c0_66 = arith.constant 0 : index
    %c0_67 = arith.constant 0 : index
    %124 = vector.load %arg17[%c0_65, %c0_66, %c0_67] : memref<1x1x128xf32, #tpu.memory_space<vmem>>, vector<1x1x128xf32>
    %125 = vector.shape_cast %124 : vector<1x1x128xf32> to vector<1x128xf32>
    %126 = vector.broadcast %125 : vector<1x128xf32> to vector<8x128xf32>
    %127 = arith.mulf %123, %126 : vector<8x128xf32>
    %c0_68 = arith.constant 0 : index
    %c0_69 = arith.constant 0 : index
    %c0_70 = arith.constant 0 : index
    %128 = vector.load %arg18[%c0_68, %c0_69, %c0_70] : memref<1x1x128xf32, #tpu.memory_space<vmem>>, vector<1x1x128xf32>
    %129 = vector.shape_cast %128 : vector<1x1x128xf32> to vector<1x128xf32>
    %130 = vector.broadcast %129 : vector<1x128xf32> to vector<8x128xf32>
    %131 = arith.addf %127, %130 : vector<8x128xf32>
    %c0_71 = arith.constant 0 : index
    %c0_72 = arith.constant 0 : index
    %132 = vector.load %arg20[%c0_71, %c0_72] : memref<8x128xf32, #tpu.memory_space<vmem>>, vector<8x128xf32>
    tpu.vector_store %arg20[%c0_71, %c0_72], %131 {strides = array<i32>} : memref<8x128xf32, #tpu.memory_space<vmem>>, vector<8x128xf32>,
    %c1_i32 = arith.constant 1 : i32
    %133 = arith.cmpi eq, %arg1, %c1_i32 : i32
    %134 = arith.extui %133 : i1 to i32
    %c0_i32_73 = arith.constant 0 : i32
    %135 = arith.cmpi ne, %134, %c0_i32_73 : i32
    scf.if %135 {
      %c0_74 = arith.constant 0 : index
      %c0_75 = arith.constant 0 : index
      %c0_76 = arith.constant 0 : index
      %136 = vector.load %arg19[%c0_74, %c0_75, %c0_76] : memref<1x8x128xf32, #tpu.memory_space<vmem>>, vector<1x8x128xf32>
      %137 = vector.shape_cast %136 : vector<1x8x128xf32> to vector<8x128xf32>
      %138 = vector.shape_cast %131 : vector<8x128xf32> to vector<1x8x128xf32>
      tpu.vector_store %arg19[%c0_74, %c0_75, %c0_76], %138 {strides = array<i32>} : memref<1x8x128xf32, #tpu.memory_space<vmem>>, vector<1x8x128xf32>,
    } else {
    }
    return
  }
  func.func @transform_0(%arg0: i32, %arg1: i32) -> (i32, i32, i32) {
    %c0_i32 = arith.constant 0 : i32
    %c0_i32_0 = arith.constant 0 : i32
    %c0_i32_1 = arith.constant 0 : i32
    return %arg0, %c0_i32, %c0_i32_0 : i32, i32, i32
  }
  func.func @transform_1(%arg0: i32, %arg1: i32) -> (i32, i32, i32) {
    %c0_i32 = arith.constant 0 : i32
    %c0_i32_0 = arith.constant 0 : i32
    %c0_i32_1 = arith.constant 0 : i32
    return %arg1, %c0_i32, %c0_i32_0 : i32, i32, i32
  }
  func.func @transform_2(%arg0: i32, %arg1: i32) -> (i32, i32, i32) {
    %c0_i32 = arith.constant 0 : i32
    %c0_i32_0 = arith.constant 0 : i32
    %c0_i32_1 = arith.constant 0 : i32
    return %arg1, %c0_i32, %c0_i32_0 : i32, i32, i32
  }
  func.func @transform_3(%arg0: i32, %arg1: i32) -> (i32, i32, i32) {
    %c0_i32 = arith.constant 0 : i32
    %c0_i32_0 = arith.constant 0 : i32
    %c0_i32_1 = arith.constant 0 : i32
    return %arg1, %c0_i32, %c0_i32_0 : i32, i32, i32
  }
  func.func @transform_4(%arg0: i32, %arg1: i32) -> (i32, i32, i32) {
    %c0_i32 = arith.constant 0 : i32
    %c0_i32_0 = arith.constant 0 : i32
    %c0_i32_1 = arith.constant 0 : i32
    return %arg1, %c0_i32, %c0_i32_0 : i32, i32, i32
  }
  func.func @transform_5(%arg0: i32, %arg1: i32) -> (i32, i32, i32) {
    %c0_i32 = arith.constant 0 : i32
    %c0_i32_0 = arith.constant 0 : i32
    %c0_i32_1 = arith.constant 0 : i32
    return %arg1, %c0_i32, %c0_i32_0 : i32, i32, i32
  }
  func.func @transform_6(%arg0: i32, %arg1: i32) -> (i32, i32, i32) {
    %c0_i32 = arith.constant 0 : i32
    %c0_i32_0 = arith.constant 0 : i32
    %c0_i32_1 = arith.constant 0 : i32
    return %arg1, %c0_i32, %c0_i32_0 : i32, i32, i32
  }
  func.func @transform_7(%arg0: i32, %arg1: i32) -> (i32, i32, i32) {
    %c0_i32 = arith.constant 0 : i32
    %c0_i32_0 = arith.constant 0 : i32
    %c0_i32_1 = arith.constant 0 : i32
    return %arg1, %c0_i32, %c0_i32_0 : i32, i32, i32
  }
  func.func @transform_8(%arg0: i32, %arg1: i32) -> (i32, i32, i32) {
    %c0_i32 = arith.constant 0 : i32
    %c0_i32_0 = arith.constant 0 : i32
    %c0_i32_1 = arith.constant 0 : i32
    return %arg1, %c0_i32, %c0_i32_0 : i32, i32, i32
  }
  func.func @transform_9(%arg0: i32, %arg1: i32) -> (i32, i32, i32) {
    %c0_i32 = arith.constant 0 : i32
    %c0_i32_0 = arith.constant 0 : i32
    %c0_i32_1 = arith.constant 0 : i32
    return %arg1, %c0_i32, %c0_i32_0 : i32, i32, i32
  }
  func.func @transform_10(%arg0: i32, %arg1: i32) -> (i32, i32, i32) {
    %c0_i32 = arith.constant 0 : i32
    %c0_i32_0 = arith.constant 0 : i32
    %c0_i32_1 = arith.constant 0 : i32
    return %arg1, %c0_i32, %c0_i32_0 : i32, i32, i32
  }
  func.func @transform_11(%arg0: i32, %arg1: i32) -> (i32, i32, i32) {
    %c0_i32 = arith.constant 0 : i32
    %c0_i32_0 = arith.constant 0 : i32
    %c0_i32_1 = arith.constant 0 : i32
    return %arg1, %c0_i32, %c0_i32_0 : i32, i32, i32
  }
  func.func @transform_12(%arg0: i32, %arg1: i32) -> (i32, i32, i32) {
    %c0_i32 = arith.constant 0 : i32
    %c0_i32_0 = arith.constant 0 : i32
    %c0_i32_1 = arith.constant 0 : i32
    return %arg1, %c0_i32, %c0_i32_0 : i32, i32, i32
  }
  func.func @transform_13(%arg0: i32, %arg1: i32) -> (i32, i32, i32) {
    %c0_i32 = arith.constant 0 : i32
    %c0_i32_0 = arith.constant 0 : i32
    %c0_i32_1 = arith.constant 0 : i32
    return %arg1, %c0_i32, %c0_i32_0 : i32, i32, i32
  }
  func.func @transform_14(%arg0: i32, %arg1: i32) -> (i32, i32, i32) {
    %c0_i32 = arith.constant 0 : i32
    %c0_i32_0 = arith.constant 0 : i32
    %c0_i32_1 = arith.constant 0 : i32
    return %arg1, %c0_i32, %c0_i32_0 : i32, i32, i32
  }
  func.func @transform_15(%arg0: i32, %arg1: i32) -> (i32, i32, i32) {
    %c0_i32 = arith.constant 0 : i32
    %c0_i32_0 = arith.constant 0 : i32
    %c0_i32_1 = arith.constant 0 : i32
    return %arg1, %c0_i32, %c0_i32_0 : i32, i32, i32
  }
  func.func @transform_16(%arg0: i32, %arg1: i32) -> (i32, i32, i32) {
    %c0_i32 = arith.constant 0 : i32
    %c0_i32_0 = arith.constant 0 : i32
    %c0_i32_1 = arith.constant 0 : i32
    return %arg1, %c0_i32, %c0_i32_0 : i32, i32, i32
  }
  func.func @transform_17(%arg0: i32, %arg1: i32) -> (i32, i32, i32) {
    %c0_i32 = arith.constant 0 : i32
    %c0_i32_0 = arith.constant 0 : i32
    %c0_i32_1 = arith.constant 0 : i32
    return %arg0, %c0_i32, %c0_i32_0 : i32, i32, i32
  }
}

</mosaic_0001>

<llo_original>
// kernel: tpu_custom_call.1
$region0: #{tpu_custom_call.1}
  #allocation0 [shape = 'u32[]', space=smem, size = 0x4, offset = 0x4, fixed_abs, tag = 'smem constant byte address 0x4 - core index']
  #allocation1 [shape = 'u32[144,128]{1,0:T(1,128)}', space=vmem, size = 0x12000, scoped, tag = 'internal scratch']
  #allocation2 [shape = 'f32[8,128]{1,0:T(8,128)}', space=vmem, size = 0x1000, scoped, tag = 'scratch operand']
  %s0 = inlined_call_operand.hbm [shape: f32[2,8,128], index: 0, kind: input, shape index: {}]
  %s1 = inlined_call_operand.hbm [shape: bf16[2,128,128], index: 1, kind: input, shape index: {}]
  %s2 = inlined_call_operand.vmem [shape: f32[2,1,128], index: 2, kind: input, shape index: {}]
  %s3 = inlined_call_operand.hbm [shape: bf16[2,128,128], index: 3, kind: input, shape index: {}]
  %s4 = inlined_call_operand.vmem [shape: f32[2,1,128], index: 4, kind: input, shape index: {}]
  %s5 = inlined_call_operand.hbm [shape: bf16[2,128,128], index: 5, kind: input, shape index: {}]
  %s6 = inlined_call_operand.vmem [shape: f32[2,1,128], index: 6, kind: input, shape index: {}]
  %s7 = inlined_call_operand.hbm [shape: bf16[2,128,128], index: 7, kind: input, shape index: {}]
  %s8 = inlined_call_operand.vmem [shape: f32[2,1,128], index: 8, kind: input, shape index: {}]
  %s9 = inlined_call_operand.vmem [shape: f32[2,1,128], index: 9, kind: input, shape index: {}]
  %s10 = inlined_call_operand.vmem [shape: f32[2,1,128], index: 10, kind: input, shape index: {}]
  %s11 = inlined_call_operand.hbm [shape: bf16[2,128,256], index: 11, kind: input, shape index: {}]
  %s12 = inlined_call_operand.vmem [shape: f32[2,1,256], index: 12, kind: input, shape index: {}]
  %s13 = inlined_call_operand.hbm [shape: bf16[2,256,128], index: 13, kind: input, shape index: {}]
  %s14 = inlined_call_operand.vmem [shape: f32[2,1,128], index: 14, kind: input, shape index: {}]
  %s15 = inlined_call_operand.vmem [shape: f32[2,1,128], index: 15, kind: input, shape index: {}]
  %s16 = inlined_call_operand.vmem [shape: f32[2,1,128], index: 16, kind: input, shape index: {}]
  %s17 = inlined_call_operand.hbm [shape: f32[2,8,128], index: 17, kind: output, shape index: {}]
  %s18 = sld [smem:[#allocation0]]
  $region137: #{tpu_custom_call.1} parent=0
    _
  %s20 = ssub.s32 1, %s18
  %s21 = scalar_select 0, %s20, %s18
  $region1: #{tpu_custom_call.1} parent=0
    #allocation3 [shape = 'u8[8192]{0}', space=vmem, size = 0x2000, scoped, tag = 'input window, operand 0']
    #allocation4 [shape = 's32[2]{0}', space=sflag, size = 0x8, scoped, tag = 'scoped memory for tpu_custom_call.1']
    #allocation5 [shape = 's32[2]{0}', space=sflag, size = 0x8, scoped, tag = 'scoped memory for tpu_custom_call.1']
    #allocation6 [shape = 'u8[65536]{0}', space=vmem, size = 0x10000, scoped, tag = 'input window, operand 1']
    #allocation7 [shape = 's32[2]{0}', space=sflag, size = 0x8, scoped, tag = 'scoped memory for tpu_custom_call.1']
    #allocation8 [shape = 'u8[65536]{0}', space=vmem, size = 0x10000, scoped, tag = 'input window, operand 3']
    #allocation9 [shape = 'u8[65536]{0}', space=vmem, size = 0x10000, scoped, tag = 'input window, operand 5']
    #allocation10 [shape = 's32[2]{0}', space=sflag, size = 0x8, scoped, tag = 'scoped memory for tpu_custom_call.1']
    #allocation11 [shape = 'u8[65536]{0}', space=vmem, size = 0x10000, scoped, tag = 'input window, operand 7']
    #allocation12 [shape = 'u8[131072]{0}', space=vmem, size = 0x20000, scoped, tag = 'input window, operand 11']
    #allocation13 [shape = 's32[2]{0}', space=sflag, size = 0x8, scoped, tag = 'scoped memory for tpu_custom_call.1']
    #allocation14 [shape = 'u8[131072]{0}', space=vmem, size = 0x20000, scoped, tag = 'input window, operand 13']
    #allocation15 [shape = 'u8[8192]{0}', space=vmem, size = 0x2000, scoped, tag = 'output window, operand 0']
    %22 = vsyncpa [#allocation4], 0
    %s23 = scalar_lea.sflag [#allocation4], 1
    %24 = vsyncpa %s23, 0
    %25 = vsyncpa [#allocation7], 0
    %s26 = scalar_lea.sflag [#allocation7], 1
    %27 = vsyncpa %s26, 0
    %28 = vsyncpa [#allocation10], 0
    %s29 = scalar_lea.sflag [#allocation10], 1
    %30 = vsyncpa %s29, 0
    %31 = vsyncpa [#allocation13], 0
    %s32 = scalar_lea.sflag [#allocation13], 1
    %33 = vsyncpa %s32, 0
    %34 = vsyncpa [#allocation5], 0
    %s35 = scalar_lea.sflag [#allocation5], 1
    %36 = vsyncpa %s35, 0
    loop: start=0, step=1, limit=6
    $region2: #{tpu_custom_call.1} parent=1 // loop_pre_header
      _
    $region3: #{tpu_custom_call.1} parent=1 // loop_header
      %s38 = sphi 0, %s42
      %p39 = scmp.ge.s32.totalorder %s38, 6
      %s45 = sphi 0, %s57
      %s46 = sphi 0, %s53
      %s47 = sphi 0, %s45
      %s48 = sphi 0, %s46
      %s49 = sphi 0, %s47
      %s50 = sphi 0, %s48
      %s60 = sphi 0, %s62
      %s63 = sphi 0, %s60
      %s64 = sphi 0, %s63
      %s80 = sphi 0, %s64
      %s86 = sphi 0, %s88
      %s89 = sphi 0, %s86
      %s90 = sphi 0, %s89
      %s106 = sphi 0, %s90
      %s112 = sphi 0, %s114
      %s115 = sphi 0, %s112
      %s116 = sphi 0, %s115
      %s132 = sphi 0, %s116
      %s138 = sphi 0, %s140
      %s141 = sphi 0, %s138
      %s142 = sphi 0, %s141
      %s158 = sphi 0, %s142
      %s164 = sphi 0, %s166
      %s167 = sphi 0, %s164
      %s168 = sphi 0, %s167
      %s184 = sphi 0, %s168
      %s190 = sphi 0, %s192
      %s193 = sphi 0, %s190
      %s194 = sphi 0, %s193
      %s210 = sphi 0, %s194
      %s216 = sphi 0, %s218
      %s219 = sphi 0, %s216
      %s220 = sphi 0, %s219
      %s236 = sphi 0, %s220
      %s242 = sphi 0, %s244
      %s245 = sphi 0, %s242
      %s246 = sphi 0, %s245
      %s262 = sphi 0, %s246
      %s268 = sphi 0, %s270
      %s271 = sphi 0, %s268
      %s272 = sphi 0, %s271
      %s288 = sphi 0, %s272
      %s294 = sphi 0, %s296
      %s297 = sphi 0, %s294
      %s298 = sphi 0, %s297
      %s314 = sphi 0, %s298
      %s320 = sphi 0, %s322
      %s323 = sphi 0, %s320
      %s324 = sphi 0, %s323
      %s340 = sphi 0, %s324
      %s346 = sphi 0, %s348
      %s349 = sphi 0, %s346
      %s350 = sphi 0, %s349
      %s366 = sphi 0, %s350
      %s372 = sphi 0, %s374
      %s375 = sphi 0, %s372
      %s376 = sphi 0, %s375
      %s392 = sphi 0, %s376
      %s398 = sphi 0, %s400
      %s401 = sphi 0, %s398
      %s402 = sphi 0, %s401
      %s418 = sphi 0, %s402
      %s424 = sphi 0, %s426
      %s427 = sphi 0, %s424
      %s428 = sphi 0, %s427
      %s444 = sphi 0, %s428
      %s450 = sphi 0, %s452
      %s453 = sphi 0, %s450
      %s454 = sphi 0, %s453
      %s470 = sphi 0, %s454
      %s476 = sphi 0, %s478
      %s479 = sphi 0, %s476
      %s480 = sphi 0, %s479
      %s496 = sphi 0, %s480
      %s502 = sphi 0, %s504
      %s505 = sphi 0, %s502
      %s506 = sphi 0, %s505
      %s522 = sphi 0, %s506
    $region4: #{tpu_custom_call.1} parent=1 // loop_header_branch
      %41 = sbr.rel (%p39) target = $region8
    $region5: #{tpu_custom_call.1} parent=1 // loop_body
      %s43 = ssub.s32 %s38, 1
      %s44 = ssub.s32 %s38, 2
      %s51 = sadd.s32 1, %s46
      %p52 = scmp.ge.s32.totalorder %s51, 2
      %s53 = scalar_select %p52, 0, %s51
      %s54 = sadd.s32 1, %s45
      %s55 = scalar_select %p52, %s54, %s45
      %p56 = scmp.ge.s32.totalorder %s55, 2
      %s57 = scalar_select %p56, 0, %s55
      %s58 = ssub.s32 %s45, %s57
      %p59 = scmp.eq.s32.totalorder %s58, 0
      %s61 = sadd.s32 %s60, 1
      %s62 = scalar_select %p59, %s60, %s61
      %p65 = pneg %p59
      %p66 = scmp.eq.s32.totalorder %s38, 3
      %p67 = por %p65, %p66
      %p68 = scmp.ne.s32.totalorder %s60, %s63
      %p69 = scmp.eq.s32.totalorder %s38, 0
      %p70 = por %p68, %p69
      %p71 = scmp.ne.s32.totalorder %s60, %s63
      %p72 = scmp.eq.s32.totalorder %s43, 3
      %p73 = por %p71, %p72
      %p74 = scmp.ne.s32.totalorder %s63, %s64
      %p75 = scmp.eq.s32.totalorder %s43, 0
      %p76 = por %p74, %p75
      %p77 = scmp.ne.s32.totalorder %s63, %s64
      %p78 = scmp.eq.s32.totalorder %s44, 3
      %p79 = por %p77, %p78
      %p81 = scmp.ne.s32.totalorder %s64, %s80
      %p82 = scmp.eq.s32.totalorder %s44, 0
      %p83 = por %p81, %p82
      %s84 = ssub.s32 %s46, %s53
      %p85 = scmp.eq.s32.totalorder %s84, 0
      %s87 = sadd.s32 %s86, 1
      %s88 = scalar_select %p85, %s86, %s87
      %p91 = pneg %p85
      %p92 = scmp.eq.s32.totalorder %s38, 3
      %p93 = por %p91, %p92
      %p94 = scmp.ne.s32.totalorder %s86, %s89
      %p95 = scmp.eq.s32.totalorder %s38, 0
      %p96 = por %p94, %p95
      %p97 = scmp.ne.s32.totalorder %s86, %s89
      %p98 = scmp.eq.s32.totalorder %s43, 3
      %p99 = por %p97, %p98
      %p100 = scmp.ne.s32.totalorder %s89, %s90
      %p101 = scmp.eq.s32.totalorder %s43, 0
      %p102 = por %p100, %p101
      %p103 = scmp.ne.s32.totalorder %s89, %s90
      %p104 = scmp.eq.s32.totalorder %s44, 3
      %p105 = por %p103, %p104
      %p107 = scmp.ne.s32.totalorder %s90, %s106
      %p108 = scmp.eq.s32.totalorder %s44, 0
      %p109 = por %p107, %p108
      %s110 = ssub.s32 %s46, %s53
      %p111 = scmp.eq.s32.totalorder %s110, 0
      %s113 = sadd.s32 %s112, 1
      %s114 = scalar_select %p111, %s112, %s113
      %p117 = pneg %p111
      %p118 = scmp.eq.s32.totalorder %s38, 3
      %p119 = por %p117, %p118
      %p120 = scmp.ne.s32.totalorder %s112, %s115
      %p121 = scmp.eq.s32.totalorder %s38, 0
      %p122 = por %p120, %p121
      %p123 = scmp.ne.s32.totalorder %s112, %s115
      %p124 = scmp.eq.s32.totalorder %s43, 3
      %p125 = por %p123, %p124
      %p126 = scmp.ne.s32.totalorder %s115, %s116
      %p127 = scmp.eq.s32.totalorder %s43, 0
      %p128 = por %p126, %p127
      %p129 = scmp.ne.s32.totalorder %s115, %s116
      %p130 = scmp.eq.s32.totalorder %s44, 3
      %p131 = por %p129, %p130
      %p133 = scmp.ne.s32.totalorder %s116, %s132
      %p134 = scmp.eq.s32.totalorder %s44, 0
      %p135 = por %p133, %p134
      %s136 = ssub.s32 %s46, %s53
      %p137 = scmp.eq.s32.totalorder %s136, 0
      %s139 = sadd.s32 %s138, 1
      %s140 = scalar_select %p137, %s138, %s139
      %p143 = pneg %p137
      %p144 = scmp.eq.s32.totalorder %s38, 3
      %p145 = por %p143, %p144
      %p146 = scmp.ne.s32.totalorder %s138, %s141
      %p147 = scmp.eq.s32.totalorder %s38, 0
      %p148 = por %p146, %p147
      %p149 = scmp.ne.s32.totalorder %s138, %s141
      %p150 = scmp.eq.s32.totalorder %s43, 3
      %p151 = por %p149, %p150
      %p152 = scmp.ne.s32.totalorder %s141, %s142
      %p153 = scmp.eq.s32.totalorder %s43, 0
      %p154 = por %p152, %p153
      %p155 = scmp.ne.s32.totalorder %s141, %s142
      %p156 = scmp.eq.s32.totalorder %s44, 3
      %p157 = por %p155, %p156
      %p159 = scmp.ne.s32.totalorder %s142, %s158
      %p160 = scmp.eq.s32.totalorder %s44, 0
      %p161 = por %p159, %p160
      %s162 = ssub.s32 %s46, %s53
      %p163 = scmp.eq.s32.totalorder %s162, 0
      %s165 = sadd.s32 %s164, 1
      %s166 = scalar_select %p163, %s164, %s165
      %p169 = pneg %p163
      %p170 = scmp.eq.s32.totalorder %s38, 3
      %p171 = por %p169, %p170
      %p172 = scmp.ne.s32.totalorder %s164, %s167
      %p173 = scmp.eq.s32.totalorder %s38, 0
      %p174 = por %p172, %p173
      %p175 = scmp.ne.s32.totalorder %s164, %s167
      %p176 = scmp.eq.s32.totalorder %s43, 3
      %p177 = por %p175, %p176
      %p178 = scmp.ne.s32.totalorder %s167, %s168
      %p179 = scmp.eq.s32.totalorder %s43, 0
      %p180 = por %p178, %p179
      %p181 = scmp.ne.s32.totalorder %s167, %s168
      %p182 = scmp.eq.s32.totalorder %s44, 3
      %p183 = por %p181, %p182
      %p185 = scmp.ne.s32.totalorder %s168, %s184
      %p186 = scmp.eq.s32.totalorder %s44, 0
      %p187 = por %p185, %p186
      %s188 = ssub.s32 %s46, %s53
      %p189 = scmp.eq.s32.totalorder %s188, 0
      %s191 = sadd.s32 %s190, 1
      %s192 = scalar_select %p189, %s190, %s191
      %p195 = pneg %p189
      %p196 = scmp.eq.s32.totalorder %s38, 3
      %p197 = por %p195, %p196
      %p198 = scmp.ne.s32.totalorder %s190, %s193
      %p199 = scmp.eq.s32.totalorder %s38, 0
      %p200 = por %p198, %p199
      %p201 = scmp.ne.s32.totalorder %s190, %s193
      %p202 = scmp.eq.s32.totalorder %s43, 3
      %p203 = por %p201, %p202
      %p204 = scmp.ne.s32.totalorder %s193, %s194
      %p205 = scmp.eq.s32.totalorder %s43, 0
      %p206 = por %p204, %p205
      %p207 = scmp.ne.s32.totalorder %s193, %s194
      %p208 = scmp.eq.s32.totalorder %s44, 3
      %p209 = por %p207, %p208
      %p211 = scmp.ne.s32.totalorder %s194, %s210
      %p212 = scmp.eq.s32.totalorder %s44, 0
      %p213 = por %p211, %p212
      %s214 = ssub.s32 %s46, %s53
      %p215 = scmp.eq.s32.totalorder %s214, 0
      %s217 = sadd.s32 %s216, 1
      %s218 = scalar_select %p215, %s216, %s217
      %p221 = pneg %p215
      %p222 = scmp.eq.s32.totalorder %s38, 3
      %p223 = por %p221, %p222
      %p224 = scmp.ne.s32.totalorder %s216, %s219
      %p225 = scmp.eq.s32.totalorder %s38, 0
      %p226 = por %p224, %p225
      %p227 = scmp.ne.s32.totalorder %s216, %s219
      %p228 = scmp.eq.s32.totalorder %s43, 3
      %p229 = por %p227, %p228
      %p230 = scmp.ne.s32.totalorder %s219, %s220
      %p231 = scmp.eq.s32.totalorder %s43, 0
      %p232 = por %p230, %p231
      %p233 = scmp.ne.s32.totalorder %s219, %s220
      %p234 = scmp.eq.s32.totalorder %s44, 3
      %p235 = por %p233, %p234
      %p237 = scmp.ne.s32.totalorder %s220, %s236
      %p238 = scmp.eq.s32.totalorder %s44, 0
      %p239 = por %p237, %p238
      %s240 = ssub.s32 %s46, %s53
      %p241 = scmp.eq.s32.totalorder %s240, 0
      %s243 = sadd.s32 %s242, 1
      %s244 = scalar_select %p241, %s242, %s243
      %p247 = pneg %p241
      %p248 = scmp.eq.s32.totalorder %s38, 3
      %p249 = por %p247, %p248
      %p250 = scmp.ne.s32.totalorder %s242, %s245
      %p251 = scmp.eq.s32.totalorder %s38, 0
      %p252 = por %p250, %p251
      %p253 = scmp.ne.s32.totalorder %s242, %s245
      %p254 = scmp.eq.s32.totalorder %s43, 3
      %p255 = por %p253, %p254
      %p256 = scmp.ne.s32.totalorder %s245, %s246
      %p257 = scmp.eq.s32.totalorder %s43, 0
      %p258 = por %p256, %p257
      %p259 = scmp.ne.s32.totalorder %s245, %s246
      %p260 = scmp.eq.s32.totalorder %s44, 3
      %p261 = por %p259, %p260
      %p263 = scmp.ne.s32.totalorder %s246, %s262
      %p264 = scmp.eq.s32.totalorder %s44, 0
      %p265 = por %p263, %p264
      %s266 = ssub.s32 %s46, %s53
      %p267 = scmp.eq.s32.totalorder %s266, 0
      %s269 = sadd.s32 %s268, 1
      %s270 = scalar_select %p267, %s268, %s269
      %p273 = pneg %p267
      %p274 = scmp.eq.s32.totalorder %s38, 3
      %p275 = por %p273, %p274
      %p276 = scmp.ne.s32.totalorder %s268, %s271
      %p277 = scmp.eq.s32.totalorder %s38, 0
      %p278 = por %p276, %p277
      %p279 = scmp.ne.s32.totalorder %s268, %s271
      %p280 = scmp.eq.s32.totalorder %s43, 3
      %p281 = por %p279, %p280
      %p282 = scmp.ne.s32.totalorder %s271, %s272
      %p283 = scmp.eq.s32.totalorder %s43, 0
      %p284 = por %p282, %p283
      %p285 = scmp.ne.s32.totalorder %s271, %s272
      %p286 = scmp.eq.s32.totalorder %s44, 3
      %p287 = por %p285, %p286
      %p289 = scmp.ne.s32.totalorder %s272, %s288
      %p290 = scmp.eq.s32.totalorder %s44, 0
      %p291 = por %p289, %p290
      %s292 = ssub.s32 %s46, %s53
      %p293 = scmp.eq.s32.totalorder %s292, 0
      %s295 = sadd.s32 %s294, 1
      %s296 = scalar_select %p293, %s294, %s295
      %p299 = pneg %p293
      %p300 = scmp.eq.s32.totalorder %s38, 3
      %p301 = por %p299, %p300
      %p302 = scmp.ne.s32.totalorder %s294, %s297
      %p303 = scmp.eq.s32.totalorder %s38, 0
      %p304 = por %p302, %p303
      %p305 = scmp.ne.s32.totalorder %s294, %s297
      %p306 = scmp.eq.s32.totalorder %s43, 3
      %p307 = por %p305, %p306
      %p308 = scmp.ne.s32.totalorder %s297, %s298
      %p309 = scmp.eq.s32.totalorder %s43, 0
      %p310 = por %p308, %p309
      %p311 = scmp.ne.s32.totalorder %s297, %s298
      %p312 = scmp.eq.s32.totalorder %s44, 3
      %p313 = por %p311, %p312
      %p315 = scmp.ne.s32.totalorder %s298, %s314
      %p316 = scmp.eq.s32.totalorder %s44, 0
      %p317 = por %p315, %p316
      %s318 = ssub.s32 %s46, %s53
      %p319 = scmp.eq.s32.totalorder %s318, 0
      %s321 = sadd.s32 %s320, 1
      %s322 = scalar_select %p319, %s320, %s321
      %p325 = pneg %p319
      %p326 = scmp.eq.s32.totalorder %s38, 3
      %p327 = por %p325, %p326
      %p328 = scmp.ne.s32.totalorder %s320, %s323
      %p329 = scmp.eq.s32.totalorder %s38, 0
      %p330 = por %p328, %p329
      %p331 = scmp.ne.s32.totalorder %s320, %s323
      %p332 = scmp.eq.s32.totalorder %s43, 3
      %p333 = por %p331, %p332
      %p334 = scmp.ne.s32.totalorder %s323, %s324
      %p335 = scmp.eq.s32.totalorder %s43, 0
      %p336 = por %p334, %p335
      %p337 = scmp.ne.s32.totalorder %s323, %s324
      %p338 = scmp.eq.s32.totalorder %s44, 3
      %p339 = por %p337, %p338
      %p341 = scmp.ne.s32.totalorder %s324, %s340
      %p342 = scmp.eq.s32.totalorder %s44, 0
      %p343 = por %p341, %p342
      %s344 = ssub.s32 %s46, %s53
      %p345 = scmp.eq.s32.totalorder %s344, 0
      %s347 = sadd.s32 %s346, 1
      %s348 = scalar_select %p345, %s346, %s347
      %p351 = pneg %p345
      %p352 = scmp.eq.s32.totalorder %s38, 3
      %p353 = por %p351, %p352
      %p354 = scmp.ne.s32.totalorder %s346, %s349
      %p355 = scmp.eq.s32.totalorder %s38, 0
      %p356 = por %p354, %p355
      %p357 = scmp.ne.s32.totalorder %s346, %s349
      %p358 = scmp.eq.s32.totalorder %s43, 3
      %p359 = por %p357, %p358
      %p360 = scmp.ne.s32.totalorder %s349, %s350
      %p361 = scmp.eq.s32.totalorder %s43, 0
      %p362 = por %p360, %p361
      %p363 = scmp.ne.s32.totalorder %s349, %s350
      %p364 = scmp.eq.s32.totalorder %s44, 3
      %p365 = por %p363, %p364
      %p367 = scmp.ne.s32.totalorder %s350, %s366
      %p368 = scmp.eq.s32.totalorder %s44, 0
      %p369 = por %p367, %p368
      %s370 = ssub.s32 %s46, %s53
      %p371 = scmp.eq.s32.totalorder %s370, 0
      %s373 = sadd.s32 %s372, 1
      %s374 = scalar_select %p371, %s372, %s373
      %p377 = pneg %p371
      %p378 = scmp.eq.s32.totalorder %s38, 3
      %p379 = por %p377, %p378
      %p380 = scmp.ne.s32.totalorder %s372, %s375
      %p381 = scmp.eq.s32.totalorder %s38, 0
      %p382 = por %p380, %p381
      %p383 = scmp.ne.s32.totalorder %s372, %s375
      %p384 = scmp.eq.s32.totalorder %s43, 3
      %p385 = por %p383, %p384
      %p386 = scmp.ne.s32.totalorder %s375, %s376
      %p387 = scmp.eq.s32.totalorder %s43, 0
      %p388 = por %p386, %p387
      %p389 = scmp.ne.s32.totalorder %s375, %s376
      %p390 = scmp.eq.s32.totalorder %s44, 3
      %p391 = por %p389, %p390
      %p393 = scmp.ne.s32.totalorder %s376, %s392
      %p394 = scmp.eq.s32.totalorder %s44, 0
      %p395 = por %p393, %p394
      %s396 = ssub.s32 %s46, %s53
      %p397 = scmp.eq.s32.totalorder %s396, 0
      %s399 = sadd.s32 %s398, 1
      %s400 = scalar_select %p397, %s398, %s399
      %p403 = pneg %p397
      %p404 = scmp.eq.s32.totalorder %s38, 3
      %p405 = por %p403, %p404
      %p406 = scmp.ne.s32.totalorder %s398, %s401
      %p407 = scmp.eq.s32.totalorder %s38, 0
      %p408 = por %p406, %p407
      %p409 = scmp.ne.s32.totalorder %s398, %s401
      %p410 = scmp.eq.s32.totalorder %s43, 3
      %p411 = por %p409, %p410
      %p412 = scmp.ne.s32.totalorder %s401, %s402
      %p413 = scmp.eq.s32.totalorder %s43, 0
      %p414 = por %p412, %p413
      %p415 = scmp.ne.s32.totalorder %s401, %s402
      %p416 = scmp.eq.s32.totalorder %s44, 3
      %p417 = por %p415, %p416
      %p419 = scmp.ne.s32.totalorder %s402, %s418
      %p420 = scmp.eq.s32.totalorder %s44, 0
      %p421 = por %p419, %p420
      %s422 = ssub.s32 %s46, %s53
      %p423 = scmp.eq.s32.totalorder %s422, 0
      %s425 = sadd.s32 %s424, 1
      %s426 = scalar_select %p423, %s424, %s425
      %p429 = pneg %p423
      %p430 = scmp.eq.s32.totalorder %s38, 3
      %p431 = por %p429, %p430
      %p432 = scmp.ne.s32.totalorder %s424, %s427
      %p433 = scmp.eq.s32.totalorder %s38, 0
      %p434 = por %p432, %p433
      %p435 = scmp.ne.s32.totalorder %s424, %s427
      %p436 = scmp.eq.s32.totalorder %s43, 3
      %p437 = por %p435, %p436
      %p438 = scmp.ne.s32.totalorder %s427, %s428
      %p439 = scmp.eq.s32.totalorder %s43, 0
      %p440 = por %p438, %p439
      %p441 = scmp.ne.s32.totalorder %s427, %s428
      %p442 = scmp.eq.s32.totalorder %s44, 3
      %p443 = por %p441, %p442
      %p445 = scmp.ne.s32.totalorder %s428, %s444
      %p446 = scmp.eq.s32.totalorder %s44, 0
      %p447 = por %p445, %p446
      %s448 = ssub.s32 %s46, %s53
      %p449 = scmp.eq.s32.totalorder %s448, 0
      %s451 = sadd.s32 %s450, 1
      %s452 = scalar_select %p449, %s450, %s451
      %p455 = pneg %p449
      %p456 = scmp.eq.s32.totalorder %s38, 3
      %p457 = por %p455, %p456
      %p458 = scmp.ne.s32.totalorder %s450, %s453
      %p459 = scmp.eq.s32.totalorder %s38, 0
      %p460 = por %p458, %p459
      %p461 = scmp.ne.s32.totalorder %s450, %s453
      %p462 = scmp.eq.s32.totalorder %s43, 3
      %p463 = por %p461, %p462
      %p464 = scmp.ne.s32.totalorder %s453, %s454
      %p465 = scmp.eq.s32.totalorder %s43, 0
      %p466 = por %p464, %p465
      %p467 = scmp.ne.s32.totalorder %s453, %s454
      %p468 = scmp.eq.s32.totalorder %s44, 3
      %p469 = por %p467, %p468
      %p471 = scmp.ne.s32.totalorder %s454, %s470
      %p472 = scmp.eq.s32.totalorder %s44, 0
      %p473 = por %p471, %p472
      %s474 = ssub.s32 %s46, %s53
      %p475 = scmp.eq.s32.totalorder %s474, 0
      %s477 = sadd.s32 %s476, 1
      %s478 = scalar_select %p475, %s476, %s477
      %p481 = pneg %p475
      %p482 = scmp.eq.s32.totalorder %s38, 3
      %p483 = por %p481, %p482
      %p484 = scmp.ne.s32.totalorder %s476, %s479
      %p485 = scmp.eq.s32.totalorder %s38, 0
      %p486 = por %p484, %p485
      %p487 = scmp.ne.s32.totalorder %s476, %s479
      %p488 = scmp.eq.s32.totalorder %s43, 3
      %p489 = por %p487, %p488
      %p490 = scmp.ne.s32.totalorder %s479, %s480
      %p491 = scmp.eq.s32.totalorder %s43, 0
      %p492 = por %p490, %p491
      %p493 = scmp.ne.s32.totalorder %s479, %s480
      %p494 = scmp.eq.s32.totalorder %s44, 3
      %p495 = por %p493, %p494
      %p497 = scmp.ne.s32.totalorder %s480, %s496
      %p498 = scmp.eq.s32.totalorder %s44, 0
      %p499 = por %p497, %p498
      %s500 = ssub.s32 %s45, %s57
      %p501 = scmp.eq.s32.totalorder %s500, 0
      %s503 = sadd.s32 %s502, 1
      %s504 = scalar_select %p501, %s502, %s503
      %p507 = pneg %p501
      %p508 = scmp.eq.s32.totalorder %s38, 3
      %p509 = por %p507, %p508
      %p510 = scmp.ne.s32.totalorder %s502, %s505
      %p511 = scmp.eq.s32.totalorder %s38, 0
      %p512 = por %p510, %p511
      %p513 = scmp.ne.s32.totalorder %s502, %s505
      %p514 = scmp.eq.s32.totalorder %s43, 3
      %p515 = por %p513, %p514
      %p516 = scmp.ne.s32.totalorder %s505, %s506
      %p517 = scmp.eq.s32.totalorder %s43, 0
      %p518 = por %p516, %p517
      %p519 = scmp.ne.s32.totalorder %s505, %s506
      %p520 = scmp.eq.s32.totalorder %s44, 3
      %p521 = por %p519, %p520
      %p523 = scmp.ne.s32.totalorder %s506, %s522
      %p524 = scmp.eq.s32.totalorder %s44, 0
      %p525 = por %p523, %p524
      %p526 = scmp.le.s32.totalorder 1, %s38
      %p527 = scmp.lt.s32.totalorder %s38, 5
      %p528 = pnand %p526, %p527
      %p529 = pneg %p528
      // Predicated region
      $region9: #{tpu_custom_call.1} parent=5 // pred_check
        _
      $region10: #{tpu_custom_call.1} parent=5 // pred_check_branch
        %531 = sbr.rel (%p528) target = $region12
      $region11: #{tpu_custom_call.1} parent=5 // pred_region
        %s532 = ssub.s32 %s38, 1
      $region12: #{tpu_custom_call.1} parent=5 // pred_fallthru
        _
      %p533 = scmp.lt.s32.totalorder %s38, 4
      // Predicated region
      $region13: #{tpu_custom_call.1} parent=5 // pred_check
        %p534 = pneg %p533
      $region14: #{tpu_custom_call.1} parent=5 // pred_check_branch
        %536 = sbr.rel (%p534) target = $region16
      $region15: #{tpu_custom_call.1} parent=5 // pred_region
        // Predicated region
        $region17: #{tpu_custom_call.1} parent=15 // pred_check
          %p537 = pneg %p70
        $region18: #{tpu_custom_call.1} parent=15 // pred_check_branch
          %539 = sbr.rel (%p537) target = $region20
        $region19: #{tpu_custom_call.1} parent=15 // pred_region
          %s540 = sand.u32 %s60, 1
          %s541 = scalar_lea.sflag [#allocation4], %s540
          %s542 = sand.u32 %s60, 1
          %s543 = smul.addr %s542, 8
          %s544 = scalar_lea.vmem [#allocation3], %s543
          %s546 = ssub.s32 128, 128
          %547 = vsyncadd %s541, %s546
          %s548 = smul.addr %s45, 128
          %s549 = scalar_lea.hbm %s0, %s548
          %s551 = sshll.u32 %s544, 4
          %s552 = int_to_ptr.vmem [resolvable:$true] %s551
          %554 = dma.hbm_to_vmem [thread:$0]  %s549, 128, %s552, %s541
        $region20: #{tpu_custom_call.1} parent=15 // pred_fallthru
          _
        // Predicated region
        $region21: #{tpu_custom_call.1} parent=15 // pred_check
          %p555 = pneg %p96
        $region22: #{tpu_custom_call.1} parent=15 // pred_check_branch
          %557 = sbr.rel (%p555) target = $region24
        $region23: #{tpu_custom_call.1} parent=15 // pred_region
          %s558 = sand.u32 %s38, 1
          %s559 = scalar_lea.sflag [#allocation7], %s558
          %s560 = sand.u32 %s86, 1
          %s561 = smul.addr %s560, 64
          %s562 = scalar_lea.vmem [#allocation6], %s561
          %s564 = ssub.s32 1024, 1024
          %565 = vsyncadd %s559, %s564
          %s566 = smul.addr %s46, 16
          %s567 = smul.addr %s566, 64
          %s568 = scalar_lea.hbm %s1, %s567
          %s569 = sshll.u32 %s562, 4
          %s570 = int_to_ptr.vmem [resolvable:$true] %s569
          %575 = dma.hbm_to_vmem [thread:$0]  %s568, 1024, %s570, %s559, 64, 64, 4
        $region24: #{tpu_custom_call.1} parent=15 // pred_fallthru
          _
        // Predicated region
        $region25: #{tpu_custom_call.1} parent=15 // pred_check
          %p576 = pneg %p122
        $region26: #{tpu_custom_call.1} parent=15 // pred_check_branch
          %578 = sbr.rel (%p576) target = $region28
        $region27: #{tpu_custom_call.1} parent=15 // pred_region
          %p579 = scmp.lt.s32.totalorder %s46, 1
          %s580 = scalar_select %p579, %s46, 1
          %s581 = scalar_lea.vmem %s2, %s580
        $region28: #{tpu_custom_call.1} parent=15 // pred_fallthru
          _
        // Predicated region
        $region29: #{tpu_custom_call.1} parent=15 // pred_check
          %p582 = pneg %p148
        $region30: #{tpu_custom_call.1} parent=15 // pred_check_branch
          %584 = sbr.rel (%p582) target = $region32
        $region31: #{tpu_custom_call.1} parent=15 // pred_region
          %s585 = sand.u32 %s38, 1
          %s586 = scalar_lea.sflag [#allocation7], %s585
          %s587 = sand.u32 %s138, 1
          %s588 = smul.addr %s587, 64
          %s589 = scalar_lea.vmem [#allocation8], %s588
          %s591 = ssub.s32 1024, 1024
          %592 = vsyncadd %s586, %s591
          %s593 = smul.addr %s46, 16
          %s594 = smul.addr %s593, 64
          %s595 = scalar_lea.hbm %s3, %s594
          %s596 = sshll.u32 %s589, 4
          %s597 = int_to_ptr.vmem [resolvable:$true] %s596
          %602 = dma.hbm_to_vmem [thread:$0]  %s595, 1024, %s597, %s586, 64, 64, 4
        $region32: #{tpu_custom_call.1} parent=15 // pred_fallthru
          _
        // Predicated region
        $region33: #{tpu_custom_call.1} parent=15 // pred_check
          %p603 = pneg %p174
        $region34: #{tpu_custom_call.1} parent=15 // pred_check_branch
          %605 = sbr.rel (%p603) target = $region36
        $region35: #{tpu_custom_call.1} parent=15 // pred_region
          %p606 = scmp.lt.s32.totalorder %s46, 1
          %s607 = scalar_select %p606, %s46, 1
          %s608 = scalar_lea.vmem %s4, %s607
        $region36: #{tpu_custom_call.1} parent=15 // pred_fallthru
          _
        // Predicated region
        $region37: #{tpu_custom_call.1} parent=15 // pred_check
          %p609 = pneg %p200
        $region38: #{tpu_custom_call.1} parent=15 // pred_check_branch
          %611 = sbr.rel (%p609) target = $region40
        $region39: #{tpu_custom_call.1} parent=15 // pred_region
          %s612 = sand.u32 %s38, 1
          %s613 = scalar_lea.sflag [#allocation10], %s612
          %s614 = sand.u32 %s190, 1
          %s615 = smul.addr %s614, 64
          %s616 = scalar_lea.vmem [#allocation9], %s615
          %s618 = ssub.s32 1024, 1024
          %619 = vsyncadd %s613, %s618
          %s620 = smul.addr %s46, 16
          %s621 = smul.addr %s620, 64
          %s622 = scalar_lea.hbm %s5, %s621
          %s623 = sshll.u32 %s616, 4
          %s624 = int_to_ptr.vmem [resolvable:$true] %s623
          %629 = dma.hbm_to_vmem [thread:$0]  %s622, 1024, %s624, %s613, 64, 64, 4
        $region40: #{tpu_custom_call.1} parent=15 // pred_fallthru
          _
        // Predicated region
        $region41: #{tpu_custom_call.1} parent=15 // pred_check
          %p630 = pneg %p226
        $region42: #{tpu_custom_call.1} parent=15 // pred_check_branch
          %632 = sbr.rel (%p630) target = $region44
        $region43: #{tpu_custom_call.1} parent=15 // pred_region
          %p633 = scmp.lt.s32.totalorder %s46, 1
          %s634 = scalar_select %p633, %s46, 1
          %s635 = scalar_lea.vmem %s6, %s634
        $region44: #{tpu_custom_call.1} parent=15 // pred_fallthru
          _
        // Predicated region
        $region45: #{tpu_custom_call.1} parent=15 // pred_check
          %p636 = pneg %p252
        $region46: #{tpu_custom_call.1} parent=15 // pred_check_branch
          %638 = sbr.rel (%p636) target = $region48
        $region47: #{tpu_custom_call.1} parent=15 // pred_region
          %s639 = sand.u32 %s38, 1
          %s640 = scalar_lea.sflag [#allocation10], %s639
          %s641 = sand.u32 %s242, 1
          %s642 = smul.addr %s641, 64
          %s643 = scalar_lea.vmem [#allocation11], %s642
          %s645 = ssub.s32 1024, 1024
          %646 = vsyncadd %s640, %s645
          %s647 = smul.addr %s46, 16
          %s648 = smul.addr %s647, 64
          %s649 = scalar_lea.hbm %s7, %s648
          %s650 = sshll.u32 %s643, 4
          %s651 = int_to_ptr.vmem [resolvable:$true] %s650
          %656 = dma.hbm_to_vmem [thread:$0]  %s649, 1024, %s651, %s640, 64, 64, 4
        $region48: #{tpu_custom_call.1} parent=15 // pred_fallthru
          _
        // Predicated region
        $region49: #{tpu_custom_call.1} parent=15 // pred_check
          %p657 = pneg %p278
        $region50: #{tpu_custom_call.1} parent=15 // pred_check_branch
          %659 = sbr.rel (%p657) target = $region52
        $region51: #{tpu_custom_call.1} parent=15 // pred_region
          %p660 = scmp.lt.s32.totalorder %s46, 1
          %s661 = scalar_select %p660, %s46, 1
          %s662 = scalar_lea.vmem %s8, %s661
        $region52: #{tpu_custom_call.1} parent=15 // pred_fallthru
          _
        // Predicated region
        $region53: #{tpu_custom_call.1} parent=15 // pred_check
          %p663 = pneg %p304
        $region54: #{tpu_custom_call.1} parent=15 // pred_check_branch
          %665 = sbr.rel (%p663) target = $region56
        $region55: #{tpu_custom_call.1} parent=15 // pred_region
          %p666 = scmp.lt.s32.totalorder %s46, 1
          %s667 = scalar_select %p666, %s46, 1
          %s668 = scalar_lea.vmem %s9, %s667
        $region56: #{tpu_custom_call.1} parent=15 // pred_fallthru
          _
        // Predicated region
        $region57: #{tpu_custom_call.1} parent=15 // pred_check
          %p669 = pneg %p330
        $region58: #{tpu_custom_call.1} parent=15 // pred_check_branch
          %671 = sbr.rel (%p669) target = $region60
        $region59: #{tpu_custom_call.1} parent=15 // pred_region
          %p672 = scmp.lt.s32.totalorder %s46, 1
          %s673 = scalar_select %p672, %s46, 1
          %s674 = scalar_lea.vmem %s10, %s673
        $region60: #{tpu_custom_call.1} parent=15 // pred_fallthru
          _
        // Predicated region
        $region61: #{tpu_custom_call.1} parent=15 // pred_check
          %p675 = pneg %p356
        $region62: #{tpu_custom_call.1} parent=15 // pred_check_branch
          %677 = sbr.rel (%p675) target = $region64
        $region63: #{tpu_custom_call.1} parent=15 // pred_region
          %s678 = sand.u32 %s38, 1
          %s679 = scalar_lea.sflag [#allocation13], %s678
          %s680 = sand.u32 %s346, 1
          %s681 = smul.addr %s680, 128
          %s682 = scalar_lea.vmem [#allocation12], %s681
          %s684 = ssub.s32 2048, 2048
          %685 = vsyncadd %s679, %s684
          %s686 = smul.addr %s46, 32
          %s687 = smul.addr %s686, 64
          %s688 = scalar_lea.hbm %s11, %s687
          %s689 = sshll.u32 %s682, 4
          %s690 = int_to_ptr.vmem [resolvable:$true] %s689
          %695 = dma.hbm_to_vmem [thread:$0]  %s688, 2048, %s690, %s679, 128, 128, 8
        $region64: #{tpu_custom_call.1} parent=15 // pred_fallthru
          _
        // Predicated region
        $region65: #{tpu_custom_call.1} parent=15 // pred_check
          %p696 = pneg %p382
        $region66: #{tpu_custom_call.1} parent=15 // pred_check_branch
          %698 = sbr.rel (%p696) target = $region68
        $region67: #{tpu_custom_call.1} parent=15 // pred_region
          %p699 = scmp.lt.s32.totalorder %s46, 1
          %s700 = scalar_select %p699, %s46, 1
          %s701 = smul.addr %s700, 2
          %s702 = scalar_lea.vmem %s12, %s701
        $region68: #{tpu_custom_call.1} parent=15 // pred_fallthru
          _
        // Predicated region
        $region69: #{tpu_custom_call.1} parent=15 // pred_check
          %p703 = pneg %p408
        $region70: #{tpu_custom_call.1} parent=15 // pred_check_branch
          %705 = sbr.rel (%p703) target = $region72
        $region71: #{tpu_custom_call.1} parent=15 // pred_region
          %s706 = sand.u32 %s38, 1
          %s707 = scalar_lea.sflag [#allocation13], %s706
          %s708 = sand.u32 %s398, 1
          %s709 = smul.addr %s708, 128
          %s710 = scalar_lea.vmem [#allocation14], %s709
          %s712 = ssub.s32 2048, 2048
          %713 = vsyncadd %s707, %s712
          %s714 = smul.addr %s46, 32
          %s715 = smul.addr %s714, 64
          %s716 = scalar_lea.hbm %s13, %s715
          %s717 = sshll.u32 %s710, 4
          %s718 = int_to_ptr.vmem [resolvable:$true] %s717
          %723 = dma.hbm_to_vmem [thread:$0]  %s716, 2048, %s718, %s707, 64, 64, 4
        $region72: #{tpu_custom_call.1} parent=15 // pred_fallthru
          _
        // Predicated region
        $region73: #{tpu_custom_call.1} parent=15 // pred_check
          %p724 = pneg %p434
        $region74: #{tpu_custom_call.1} parent=15 // pred_check_branch
          %726 = sbr.rel (%p724) target = $region76
        $region75: #{tpu_custom_call.1} parent=15 // pred_region
          %p727 = scmp.lt.s32.totalorder %s46, 1
          %s728 = scalar_select %p727, %s46, 1
          %s729 = scalar_lea.vmem %s14, %s728
        $region76: #{tpu_custom_call.1} parent=15 // pred_fallthru
          _
        // Predicated region
        $region77: #{tpu_custom_call.1} parent=15 // pred_check
          %p730 = pneg %p460
        $region78: #{tpu_custom_call.1} parent=15 // pred_check_branch
          %732 = sbr.rel (%p730) target = $region80
        $region79: #{tpu_custom_call.1} parent=15 // pred_region
          %p733 = scmp.lt.s32.totalorder %s46, 1
          %s734 = scalar_select %p733, %s46, 1
          %s735 = scalar_lea.vmem %s15, %s734
        $region80: #{tpu_custom_call.1} parent=15 // pred_fallthru
          _
        // Predicated region
        $region81: #{tpu_custom_call.1} parent=15 // pred_check
          %p736 = pneg %p486
        $region82: #{tpu_custom_call.1} parent=15 // pred_check_branch
          %738 = sbr.rel (%p736) target = $region84
        $region83: #{tpu_custom_call.1} parent=15 // pred_region
          %p739 = scmp.lt.s32.totalorder %s46, 1
          %s740 = scalar_select %p739, %s46, 1
          %s741 = scalar_lea.vmem %s16, %s740
        $region84: #{tpu_custom_call.1} parent=15 // pred_fallthru
          _
      $region16: #{tpu_custom_call.1} parent=5 // pred_fallthru
        _
      %p742 = scmp.le.s32.totalorder 1, %s38
      %p743 = scmp.lt.s32.totalorder %s38, 5
      %p744 = pnand %p742, %p743
      %p745 = pneg %p744
      // Predicated region
      $region85: #{tpu_custom_call.1} parent=5 // pred_check
        _
      $region86: #{tpu_custom_call.1} parent=5 // pred_check_branch
        %747 = sbr.rel (%p744) target = $region88
      $region87: #{tpu_custom_call.1} parent=5 // pred_region
        %s748 = ssub.s32 %s38, 1
        %s749 = sand.u32 %s63, 1
        %s750 = scalar_lea.sflag [#allocation4], %s749
        %s751 = sand.u32 %s63, 1
        %s752 = smul.addr %s751, 8
        %s753 = scalar_lea.vmem [#allocation3], %s752
        // Predicated region
        $region89: #{tpu_custom_call.1} parent=87 // pred_check
          %p754 = pneg %p76
        $region90: #{tpu_custom_call.1} parent=87 // pred_check_branch
          %756 = sbr.rel (%p754) target = $region92
        $region91: #{tpu_custom_call.1} parent=87 // pred_region
          %757 = dma.done %s750, 128
        $region92: #{tpu_custom_call.1} parent=87 // pred_fallthru
          _
        %s758 = sand.u32 %s43, 1
        %s759 = scalar_lea.sflag [#allocation7], %s758
        %s760 = sand.u32 %s89, 1
        %s761 = smul.addr %s760, 64
        %s762 = scalar_lea.vmem [#allocation6], %s761
        // Predicated region
        $region93: #{tpu_custom_call.1} parent=87 // pred_check
          %p763 = pneg %p102
        $region94: #{tpu_custom_call.1} parent=87 // pred_check_branch
          %765 = sbr.rel (%p763) target = $region96
        $region95: #{tpu_custom_call.1} parent=87 // pred_region
          %766 = dma.done %s759, 1024
        $region96: #{tpu_custom_call.1} parent=87 // pred_fallthru
          _
        %s767 = sand.u32 %s43, 1
        %s768 = scalar_lea.sflag [#allocation7], %s767
        %s769 = sand.u32 %s141, 1
        %s770 = smul.addr %s769, 64
        %s771 = scalar_lea.vmem [#allocation8], %s770
        // Predicated region
        $region97: #{tpu_custom_call.1} parent=87 // pred_check
          %p772 = pneg %p154
        $region98: #{tpu_custom_call.1} parent=87 // pred_check_branch
          %774 = sbr.rel (%p772) target = $region100
        $region99: #{tpu_custom_call.1} parent=87 // pred_region
          %775 = dma.done %s768, 1024
        $region100: #{tpu_custom_call.1} parent=87 // pred_fallthru
          _
        %s776 = sand.u32 %s43, 1
        %s777 = scalar_lea.sflag [#allocation10], %s776
        %s778 = sand.u32 %s193, 1
        %s779 = smul.addr %s778, 64
        %s780 = scalar_lea.vmem [#allocation9], %s779
        // Predicated region
        $region101: #{tpu_custom_call.1} parent=87 // pred_check
          %p781 = pneg %p206
        $region102: #{tpu_custom_call.1} parent=87 // pred_check_branch
          %783 = sbr.rel (%p781) target = $region104
        $region103: #{tpu_custom_call.1} parent=87 // pred_region
          %784 = dma.done %s777, 1024
        $region104: #{tpu_custom_call.1} parent=87 // pred_fallthru
          _
        %s785 = sand.u32 %s43, 1
        %s786 = scalar_lea.sflag [#allocation10], %s785
        %s787 = sand.u32 %s245, 1
        %s788 = smul.addr %s787, 64
        %s789 = scalar_lea.vmem [#allocation11], %s788
        // Predicated region
        $region105: #{tpu_custom_call.1} parent=87 // pred_check
          %p790 = pneg %p258
        $region106: #{tpu_custom_call.1} parent=87 // pred_check_branch
          %792 = sbr.rel (%p790) target = $region108
        $region107: #{tpu_custom_call.1} parent=87 // pred_region
          %793 = dma.done %s786, 1024
        $region108: #{tpu_custom_call.1} parent=87 // pred_fallthru
          _
        %s794 = sand.u32 %s43, 1
        %s795 = scalar_lea.sflag [#allocation13], %s794
        %s796 = sand.u32 %s349, 1
        %s797 = smul.addr %s796, 128
        %s798 = scalar_lea.vmem [#allocation12], %s797
        // Predicated region
        $region109: #{tpu_custom_call.1} parent=87 // pred_check
          %p799 = pneg %p362
        $region110: #{tpu_custom_call.1} parent=87 // pred_check_branch
          %801 = sbr.rel (%p799) target = $region112
        $region111: #{tpu_custom_call.1} parent=87 // pred_region
          %802 = dma.done %s795, 2048
        $region112: #{tpu_custom_call.1} parent=87 // pred_fallthru
          _
        %s803 = sand.u32 %s43, 1
        %s804 = scalar_lea.sflag [#allocation13], %s803
        %s805 = sand.u32 %s401, 1
        %s806 = smul.addr %s805, 128
        %s807 = scalar_lea.vmem [#allocation14], %s806
        // Predicated region
        $region113: #{tpu_custom_call.1} parent=87 // pred_check
          %p808 = pneg %p414
        $region114: #{tpu_custom_call.1} parent=87 // pred_check_branch
          %810 = sbr.rel (%p808) target = $region116
        $region115: #{tpu_custom_call.1} parent=87 // pred_region
          %811 = dma.done %s804, 2048
        $region116: #{tpu_custom_call.1} parent=87 // pred_fallthru
          _
        %s812 = sand.u32 %s63, 1
        %s813 = scalar_lea.sflag [#allocation4], %s812
        %s814 = sand.u32 %s63, 1
        %s815 = smul.addr %s814, 8
        %s816 = scalar_lea.vmem [#allocation3], %s815
        %p817 = pneg %p76
        %p818 = pneg %p73
        %s819 = sand.u32 %s43, 1
        %s820 = scalar_lea.sflag [#allocation7], %s819
        %s821 = sand.u32 %s89, 1
        %s822 = smul.addr %s821, 64
        %s823 = scalar_lea.vmem [#allocation6], %s822
        %p824 = pneg %p102
        %p825 = pneg %p99
        %p826 = scmp.lt.s32.totalorder %s48, 1
        %s827 = scalar_select %p826, %s48, 1
        %s828 = scalar_lea.vmem %s2, %s827
        %p829 = pneg %p128
        %p830 = pneg %p125
        %s831 = sand.u32 %s43, 1
        %s832 = scalar_lea.sflag [#allocation7], %s831
        %s833 = sand.u32 %s141, 1
        %s834 = smul.addr %s833, 64
        %s835 = scalar_lea.vmem [#allocation8], %s834
        %p836 = pneg %p154
        %p837 = pneg %p151
        %p838 = scmp.lt.s32.totalorder %s48, 1
        %s839 = scalar_select %p838, %s48, 1
        %s840 = scalar_lea.vmem %s4, %s839
        %p841 = pneg %p180
        %p842 = pneg %p177
        %s843 = sand.u32 %s43, 1
        %s844 = scalar_lea.sflag [#allocation10], %s843
        %s845 = sand.u32 %s193, 1
        %s846 = smul.addr %s845, 64
        %s847 = scalar_lea.vmem [#allocation9], %s846
        %p848 = pneg %p206
        %p849 = pneg %p203
        %p850 = scmp.lt.s32.totalorder %s48, 1
        %s851 = scalar_select %p850, %s48, 1
        %s852 = scalar_lea.vmem %s6, %s851
        %p853 = pneg %p232
        %p854 = pneg %p229
        %s855 = sand.u32 %s43, 1
        %s856 = scalar_lea.sflag [#allocation10], %s855
        %s857 = sand.u32 %s245, 1
        %s858 = smul.addr %s857, 64
        %s859 = scalar_lea.vmem [#allocation11], %s858
        %p860 = pneg %p258
        %p861 = pneg %p255
        %p862 = scmp.lt.s32.totalorder %s48, 1
        %s863 = scalar_select %p862, %s48, 1
        %s864 = scalar_lea.vmem %s8, %s863
        %p865 = pneg %p284
        %p866 = pneg %p281
        %p867 = scmp.lt.s32.totalorder %s48, 1
        %s868 = scalar_select %p867, %s48, 1
        %s869 = scalar_lea.vmem %s9, %s868
        %p870 = pneg %p310
        %p871 = pneg %p307
        %p872 = scmp.lt.s32.totalorder %s48, 1
        %s873 = scalar_select %p872, %s48, 1
        %s874 = scalar_lea.vmem %s10, %s873
        %p875 = pneg %p336
        %p876 = pneg %p333
        %s877 = sand.u32 %s43, 1
        %s878 = scalar_lea.sflag [#allocation13], %s877
        %s879 = sand.u32 %s349, 1
        %s880 = smul.addr %s879, 128
        %s881 = scalar_lea.vmem [#allocation12], %s880
        %p882 = pneg %p362
        %p883 = pneg %p359
        %p884 = scmp.lt.s32.totalorder %s48, 1
        %s885 = scalar_select %p884, %s48, 1
        %s886 = smul.addr %s885, 2
        %s887 = scalar_lea.vmem %s12, %s886
        %p888 = pneg %p388
        %p889 = pneg %p385
        %s890 = sand.u32 %s43, 1
        %s891 = scalar_lea.sflag [#allocation13], %s890
        %s892 = sand.u32 %s401, 1
        %s893 = smul.addr %s892, 128
        %s894 = scalar_lea.vmem [#allocation14], %s893
        %p895 = pneg %p414
        %p896 = pneg %p411
        %p897 = scmp.lt.s32.totalorder %s48, 1
        %s898 = scalar_select %p897, %s48, 1
        %s899 = scalar_lea.vmem %s14, %s898
        %p900 = pneg %p440
        %p901 = pneg %p437
        %p902 = scmp.lt.s32.totalorder %s48, 1
        %s903 = scalar_select %p902, %s48, 1
        %s904 = scalar_lea.vmem %s15, %s903
        %p905 = pneg %p466
        %p906 = pneg %p463
        %p907 = scmp.lt.s32.totalorder %s48, 1
        %s908 = scalar_select %p907, %s48, 1
        %s909 = scalar_lea.vmem %s16, %s908
        %p910 = pneg %p492
        %p911 = pneg %p489
        %p912 = pneg %p518
        %p913 = pneg %p515
        %s914 = sand.u32 %s505, 1
        %s915 = scalar_lea.sflag [#allocation5], %s914
        %s916 = sand.u32 %s505, 1
        %s917 = smul.addr %s916, 8
        %s918 = scalar_lea.vmem [#allocation15], %s917
        %p919 = scmp.lt.s32.totalorder %s48, 1
        %s920 = scalar_select %p919, %s48, 1
        %s921 = scalar_lea.vmem %s2, %s920
        %p922 = scmp.lt.s32.totalorder %s48, 1
        %s923 = scalar_select %p922, %s48, 1
        %s924 = scalar_lea.vmem %s4, %s923
        %p925 = scmp.lt.s32.totalorder %s48, 1
        %s926 = scalar_select %p925, %s48, 1
        %s927 = scalar_lea.vmem %s6, %s926
        %p928 = scmp.lt.s32.totalorder %s48, 1
        %s929 = scalar_select %p928, %s48, 1
        %s930 = scalar_lea.vmem %s8, %s929
        %p931 = scmp.lt.s32.totalorder %s48, 1
        %s932 = scalar_select %p931, %s48, 1
        %s933 = scalar_lea.vmem %s9, %s932
        %p934 = scmp.lt.s32.totalorder %s48, 1
        %s935 = scalar_select %p934, %s48, 1
        %s936 = scalar_lea.vmem %s10, %s935
        %p937 = scmp.lt.s32.totalorder %s48, 1
        %s938 = scalar_select %p937, %s48, 1
        %s939 = smul.addr %s938, 2
        %s940 = scalar_lea.vmem %s12, %s939
        %p941 = scmp.lt.s32.totalorder %s48, 1
        %s942 = scalar_select %p941, %s48, 1
        %s943 = scalar_lea.vmem %s14, %s942
        %p944 = scmp.lt.s32.totalorder %s48, 1
        %s945 = scalar_select %p944, %s48, 1
        %s946 = scalar_lea.vmem %s15, %s945
        %p947 = scmp.lt.s32.totalorder %s48, 1
        %s948 = scalar_select %p947, %s48, 1
        %s949 = scalar_lea.vmem %s16, %s948
        %p951 = scmp.eq.s32.totalorder %s48, 0
        // Predicated region
        $region117: #{tpu_custom_call.1} parent=87 // pred_check
          %p952 = pneg %p951
        $region118: #{tpu_custom_call.1} parent=87 // pred_check_branch
          %954 = sbr.rel (%p952) target = $region120
        $region119: #{tpu_custom_call.1} parent=87 // pred_region
          %v955 = vld [vmem:[%s753] sm:$0xff]
          %956 = vst [vmem:[#allocation2] sm:$0xff] %v955
        $region120: #{tpu_custom_call.1} parent=87 // pred_fallthru
          _
        %v957 = vld [vmem:[#allocation2] sm:$0xff]
        %v958 = vpack.c.bf16 %v957, %v957
        %v959 = vld [vmem:[%s762] sm:$0xf]
        %v960 = vld [vmem:[%s762 + $0x4] sm:$0xf]
        %v961 = vld [vmem:[%s762 + $0x8] sm:$0xf]
        %v962 = vld [vmem:[%s762 + $0xc] sm:$0xf]
        %v963 = vld [vmem:[%s762 + $0x10] sm:$0xf]
        %v964 = vld [vmem:[%s762 + $0x14] sm:$0xf]
        %v965 = vld [vmem:[%s762 + $0x18] sm:$0xf]
        %v966 = vld [vmem:[%s762 + $0x1c] sm:$0xf]
        %v967 = vld [vmem:[%s762 + $0x20] sm:$0xf]
        %v968 = vld [vmem:[%s762 + $0x24] sm:$0xf]
        %v969 = vld [vmem:[%s762 + $0x28] sm:$0xf]
        %v970 = vld [vmem:[%s762 + $0x2c] sm:$0xf]
        %v971 = vld [vmem:[%s762 + $0x30] sm:$0xf]
        %v972 = vld [vmem:[%s762 + $0x34] sm:$0xf]
        %v973 = vld [vmem:[%s762 + $0x38] sm:$0xf]
        %v974 = vld [vmem:[%s762 + $0x3c] sm:$0xf]
        %v975 = vld [vmem:[%s921] sm:$0x1]
        %v977 = vlaneseq
        %v978 = vshrl.u32 %v977, 7
        %v979 = vsub.s32 0, %v978
        %v980 = vrot.slane %v975, %v979
        %v998 = vunpack.c.l.b16 %v959
        %v999 = vunpack.c.l.b16 %v960
        %v1000 = vunpack.c.l.b16 %v961
        %v1001 = vunpack.c.l.b16 %v962
        %v1002 = vunpack.c.l.b16 %v963
        %v1003 = vunpack.c.l.b16 %v964
        %v1004 = vunpack.c.l.b16 %v965
        %v1005 = vunpack.c.l.b16 %v966
        %v1006 = vunpack.c.l.b16 %v967
        %v1007 = vunpack.c.l.b16 %v968
        %v1008 = vunpack.c.l.b16 %v969
        %v1009 = vunpack.c.l.b16 %v970
        %v1010 = vunpack.c.l.b16 %v971
        %v1011 = vunpack.c.l.b16 %v972
        %v1012 = vunpack.c.l.b16 %v973
        %v1013 = vunpack.c.l.b16 %v974
        %v1014 = vpack.c.b16 %v999, %v998
        %v1015 = vpack.c.b16 %v1001, %v1000
        %v1016 = vpack.c.b16 %v1003, %v1002
        %v1017 = vpack.c.b16 %v1005, %v1004
        %v1018 = vpack.c.b16 %v1007, %v1006
        %v1019 = vpack.c.b16 %v1009, %v1008
        %v1020 = vpack.c.b16 %v1011, %v1010
        %v1021 = vpack.c.b16 %v1013, %v1012
        %1030 = vmatprep.subr.bf16.mxu0 0
        %1031 = vmatpush1.bf16.msra.mxu0 %v1014
        %1032 = vmatprep.subr.bf16.mxu0 0
        %1033 = vmatpush1.bf16.msra.mxu0 %v1015
        %1034 = vmatprep.subr.bf16.mxu0 0
        %1035 = vmatpush1.bf16.msra.mxu0 %v1016
        %1036 = vmatprep.subr.bf16.mxu0 0
        %1037 = vmatpush1.bf16.msra.mxu0 %v1017
        %1038 = vmatprep.subr.bf16.mxu0 0
        %1039 = vmatpush1.bf16.msra.mxu0 %v1018
        %1040 = vmatprep.subr.bf16.mxu0 0
        %1041 = vmatpush1.bf16.msra.mxu0 %v1019
        %1042 = vmatprep.subr.bf16.mxu0 0
        %1043 = vmatpush1.bf16.msra.mxu0 %v1020
        %1044 = vmatprep.subr.bf16.mxu0 0
        %1045 = vmatpush1.bf16.msra.mxu0 %v1021
        %1046 = vmatprep.subr.bf16.mxu0 0
        %1047 = vmatpush1.bf16.msra.mxu0 0
        %1048 = vmatprep.subr.bf16.mxu0 0
        %1049 = vmatpush1.bf16.msra.mxu0 0
        %1050 = vmatprep.subr.bf16.mxu0 0
        %1051 = vmatpush1.bf16.msra.mxu0 0
        %1052 = vmatprep.subr.bf16.mxu0 0
        %1053 = vmatpush1.bf16.msra.mxu0 0
        %1054 = vmatprep.subr.bf16.mxu0 0
        %1055 = vmatpush1.bf16.msra.mxu0 0
        %1056 = vmatprep.subr.bf16.mxu0 0
        %1057 = vmatpush1.bf16.msra.mxu0 0
        %1058 = vmatprep.subr.bf16.mxu0 0
        %1059 = vmatpush1.bf16.msra.mxu0 0
        %1060 = vmatprep.subr.bf16.mxu0 0
        %1061 = vmatpush1.bf16.msra.mxu0 0
        %1062 = vmatprep.mubr.bf16.mxu0 0
        %1063 = vmatmul.mubr.bf16.gmra.mrb[0].mxu0 %v958
        %v1064 = vpop.f32.mrb[0].mxu0
        %v1065 = vadd.f32 %v980, %v1064
        %v1066 = vpop.f32.mrb[0].mxu0
        %v1067 = vpop.f32.mrb[0].mxu0
        %v1068 = vpop.f32.mrb[0].mxu0
        %1069 = vdwg.mxu0
        %v1070 = vld [vmem:[%s771] sm:$0xf]
        %v1071 = vld [vmem:[%s771 + $0x4] sm:$0xf]
        %v1072 = vld [vmem:[%s771 + $0x8] sm:$0xf]
        %v1073 = vld [vmem:[%s771 + $0xc] sm:$0xf]
        %v1074 = vld [vmem:[%s771 + $0x10] sm:$0xf]
        %v1075 = vld [vmem:[%s771 + $0x14] sm:$0xf]
        %v1076 = vld [vmem:[%s771 + $0x18] sm:$0xf]
        %v1077 = vld [vmem:[%s771 + $0x1c] sm:$0xf]
        %v1078 = vld [vmem:[%s771 + $0x20] sm:$0xf]
        %v1079 = vld [vmem:[%s771 + $0x24] sm:$0xf]
        %v1080 = vld [vmem:[%s771 + $0x28] sm:$0xf]
        %v1081 = vld [vmem:[%s771 + $0x2c] sm:$0xf]
        %v1082 = vld [vmem:[%s771 + $0x30] sm:$0xf]
        %v1083 = vld [vmem:[%s771 + $0x34] sm:$0xf]
        %v1084 = vld [vmem:[%s771 + $0x38] sm:$0xf]
        %v1085 = vld [vmem:[%s771 + $0x3c] sm:$0xf]
        %v1086 = vld [vmem:[%s924] sm:$0x1]
        %v1088 = vlaneseq
        %v1089 = vshrl.u32 %v1088, 7
        %v1090 = vsub.s32 0, %v1089
        %v1091 = vrot.slane %v1086, %v1090
        %v1109 = vunpack.c.l.b16 %v1070
        %v1110 = vunpack.c.l.b16 %v1071
        %v1111 = vunpack.c.l.b16 %v1072
        %v1112 = vunpack.c.l.b16 %v1073
        %v1113 = vunpack.c.l.b16 %v1074
        %v1114 = vunpack.c.l.b16 %v1075
        %v1115 = vunpack.c.l.b16 %v1076
        %v1116 = vunpack.c.l.b16 %v1077
        %v1117 = vunpack.c.l.b16 %v1078
        %v1118 = vunpack.c.l.b16 %v1079
        %v1119 = vunpack.c.l.b16 %v1080
        %v1120 = vunpack.c.l.b16 %v1081
        %v1121 = vunpack.c.l.b16 %v1082
        %v1122 = vunpack.c.l.b16 %v1083
        %v1123 = vunpack.c.l.b16 %v1084
        %v1124 = vunpack.c.l.b16 %v1085
        %v1125 = vpack.c.b16 %v1110, %v1109
        %v1126 = vpack.c.b16 %v1112, %v1111
        %v1127 = vpack.c.b16 %v1114, %v1113
        %v1128 = vpack.c.b16 %v1116, %v1115
        %v1129 = vpack.c.b16 %v1118, %v1117
        %v1130 = vpack.c.b16 %v1120, %v1119
        %v1131 = vpack.c.b16 %v1122, %v1121
        %v1132 = vpack.c.b16 %v1124, %v1123
        %1141 = vmatprep.subr.bf16.mxu0 0
        %1142 = vmatpush1.bf16.msra.mxu0 %v1125
        %1143 = vmatprep.subr.bf16.mxu0 0
        %1144 = vmatpush1.bf16.msra.mxu0 %v1126
        %1145 = vmatprep.subr.bf16.mxu0 0
        %1146 = vmatpush1.bf16.msra.mxu0 %v1127
        %1147 = vmatprep.subr.bf16.mxu0 0
        %1148 = vmatpush1.bf16.msra.mxu0 %v1128
        %1149 = vmatprep.subr.bf16.mxu0 0
        %1150 = vmatpush1.bf16.msra.mxu0 %v1129
        %1151 = vmatprep.subr.bf16.mxu0 0
        %1152 = vmatpush1.bf16.msra.mxu0 %v1130
        %1153 = vmatprep.subr.bf16.mxu0 0
        %1154 = vmatpush1.bf16.msra.mxu0 %v1131
        %1155 = vmatprep.subr.bf16.mxu0 0
        %1156 = vmatpush1.bf16.msra.mxu0 %v1132
        %1157 = vmatprep.subr.bf16.mxu0 0
        %1158 = vmatpush1.bf16.msra.mxu0 0
        %1159 = vmatprep.subr.bf16.mxu0 0
        %1160 = vmatpush1.bf16.msra.mxu0 0
        %1161 = vmatprep.subr.bf16.mxu0 0
        %1162 = vmatpush1.bf16.msra.mxu0 0
        %1163 = vmatprep.subr.bf16.mxu0 0
        %1164 = vmatpush1.bf16.msra.mxu0 0
        %1165 = vmatprep.subr.bf16.mxu0 0
        %1166 = vmatpush1.bf16.msra.mxu0 0
        %1167 = vmatprep.subr.bf16.mxu0 0
        %1168 = vmatpush1.bf16.msra.mxu0 0
        %1169 = vmatprep.subr.bf16.mxu0 0
        %1170 = vmatpush1.bf16.msra.mxu0 0
        %1171 = vmatprep.subr.bf16.mxu0 0
        %1172 = vmatpush1.bf16.msra.mxu0 0
        %1173 = vmatprep.mubr.bf16.mxu0 0
        %1174 = vmatmul.mubr.bf16.gmra.mrb[0].mxu0 %v958
        %v1175 = vpop.f32.mrb[0].mxu0
        %v1176 = vadd.f32 %v1091, %v1175
        %v1177 = vpop.f32.mrb[0].mxu0
        %v1178 = vpop.f32.mrb[0].mxu0
        %v1179 = vpop.f32.mrb[0].mxu0
        %1180 = vdwg.mxu0
        %v1181 = vld [vmem:[%s780] sm:$0xf]
        %v1182 = vld [vmem:[%s780 + $0x4] sm:$0xf]
        %v1183 = vld [vmem:[%s780 + $0x8] sm:$0xf]
        %v1184 = vld [vmem:[%s780 + $0xc] sm:$0xf]
        %v1185 = vld [vmem:[%s780 + $0x10] sm:$0xf]
        %v1186 = vld [vmem:[%s780 + $0x14] sm:$0xf]
        %v1187 = vld [vmem:[%s780 + $0x18] sm:$0xf]
        %v1188 = vld [vmem:[%s780 + $0x1c] sm:$0xf]
        %v1189 = vld [vmem:[%s780 + $0x20] sm:$0xf]
        %v1190 = vld [vmem:[%s780 + $0x24] sm:$0xf]
        %v1191 = vld [vmem:[%s780 + $0x28] sm:$0xf]
        %v1192 = vld [vmem:[%s780 + $0x2c] sm:$0xf]
        %v1193 = vld [vmem:[%s780 + $0x30] sm:$0xf]
        %v1194 = vld [vmem:[%s780 + $0x34] sm:$0xf]
        %v1195 = vld [vmem:[%s780 + $0x38] sm:$0xf]
        %v1196 = vld [vmem:[%s780 + $0x3c] sm:$0xf]
        %v1197 = vld [vmem:[%s927] sm:$0x1]
        %v1199 = vlaneseq
        %v1200 = vshrl.u32 %v1199, 7
        %v1201 = vsub.s32 0, %v1200
        %v1202 = vrot.slane %v1197, %v1201
        %v1220 = vunpack.c.l.b16 %v1181
        %v1221 = vunpack.c.l.b16 %v1182
        %v1222 = vunpack.c.l.b16 %v1183
        %v1223 = vunpack.c.l.b16 %v1184
        %v1224 = vunpack.c.l.b16 %v1185
        %v1225 = vunpack.c.l.b16 %v1186
        %v1226 = vunpack.c.l.b16 %v1187
        %v1227 = vunpack.c.l.b16 %v1188
        %v1228 = vunpack.c.l.b16 %v1189
        %v1229 = vunpack.c.l.b16 %v1190
        %v1230 = vunpack.c.l.b16 %v1191
        %v1231 = vunpack.c.l.b16 %v1192
        %v1232 = vunpack.c.l.b16 %v1193
        %v1233 = vunpack.c.l.b16 %v1194
        %v1234 = vunpack.c.l.b16 %v1195
        %v1235 = vunpack.c.l.b16 %v1196
        %v1236 = vpack.c.b16 %v1221, %v1220
        %v1237 = vpack.c.b16 %v1223, %v1222
        %v1238 = vpack.c.b16 %v1225, %v1224
        %v1239 = vpack.c.b16 %v1227, %v1226
        %v1240 = vpack.c.b16 %v1229, %v1228
        %v1241 = vpack.c.b16 %v1231, %v1230
        %v1242 = vpack.c.b16 %v1233, %v1232
        %v1243 = vpack.c.b16 %v1235, %v1234
        %1252 = vmatprep.subr.bf16.mxu0 0
        %1253 = vmatpush1.bf16.msra.mxu0 %v1236
        %1254 = vmatprep.subr.bf16.mxu0 0
        %1255 = vmatpush1.bf16.msra.mxu0 %v1237
        %1256 = vmatprep.subr.bf16.mxu0 0
        %1257 = vmatpush1.bf16.msra.mxu0 %v1238
        %1258 = vmatprep.subr.bf16.mxu0 0
        %1259 = vmatpush1.bf16.msra.mxu0 %v1239
        %1260 = vmatprep.subr.bf16.mxu0 0
        %1261 = vmatpush1.bf16.msra.mxu0 %v1240
        %1262 = vmatprep.subr.bf16.mxu0 0
        %1263 = vmatpush1.bf16.msra.mxu0 %v1241
        %1264 = vmatprep.subr.bf16.mxu0 0
        %1265 = vmatpush1.bf16.msra.mxu0 %v1242
        %1266 = vmatprep.subr.bf16.mxu0 0
        %1267 = vmatpush1.bf16.msra.mxu0 %v1243
        %1268 = vmatprep.subr.bf16.mxu0 0
        %1269 = vmatpush1.bf16.msra.mxu0 0
        %1270 = vmatprep.subr.bf16.mxu0 0
        %1271 = vmatpush1.bf16.msra.mxu0 0
        %1272 = vmatprep.subr.bf16.mxu0 0
        %1273 = vmatpush1.bf16.msra.mxu0 0
        %1274 = vmatprep.subr.bf16.mxu0 0
        %1275 = vmatpush1.bf16.msra.mxu0 0
        %1276 = vmatprep.subr.bf16.mxu0 0
        %1277 = vmatpush1.bf16.msra.mxu0 0
        %1278 = vmatprep.subr.bf16.mxu0 0
        %1279 = vmatpush1.bf16.msra.mxu0 0
        %1280 = vmatprep.subr.bf16.mxu0 0
        %1281 = vmatpush1.bf16.msra.mxu0 0
        %1282 = vmatprep.subr.bf16.mxu0 0
        %1283 = vmatpush1.bf16.msra.mxu0 0
        %1284 = vmatprep.mubr.bf16.mxu0 0
        %1285 = vmatmul.mubr.bf16.gmra.mrb[0].mxu0 %v958
        %v1286 = vpop.f32.mrb[0].mxu0
        %v1287 = vadd.f32 %v1202, %v1286
        %v1288 = vpop.f32.mrb[0].mxu0
        %v1289 = vpop.f32.mrb[0].mxu0
        %v1290 = vpop.f32.mrb[0].mxu0
        %1291 = vdwg.mxu0
        %v1292 = vmul.f32 %v1065, 0.17677669
        %1294 = vrot.lane.b32.xlu0 %v1292, 96
        %v1295 = vpop.permute.xlu0 %1294
        %1297 = vrot.lane.b32.xlu0 %v1292, 64
        %v1298 = vpop.permute.xlu0 %1297
        %1300 = vrot.lane.b32.xlu0 %v1292, 32
        %v1301 = vpop.permute.xlu0 %1300
        %v1303 = vcombine.low %v1292, %v1298
        %v1304 = vcombine.high %v1292, %v1298
        %v1306 = vunpack.c.l.s4 1983009808
        %v1307 = vunpack.c.0.s8 %v1306
        %v1308 = vlaneseq
        %v1309 = vshrl.u32 %v1308, 7
        %v1310 = vsub.s32 %v1307, %v1309
        %v1311 = vrot.slane %v1303, %v1310
        %v1313 = vunpack.c.l.s4 1983009808
        %v1314 = vunpack.c.0.s8 %v1313
        %v1315 = vlaneseq
        %v1316 = vshrl.u32 %v1315, 7
        %v1317 = vsub.s32 %v1314, %v1316
        %v1318 = vrot.slane %v1304, %v1317
        %v1319 = vcombine.low %v1295, %v1301
        %v1320 = vcombine.high %v1295, %v1301
        %v1322 = vunpack.c.l.s4 1983009808
        %v1323 = vunpack.c.0.s8 %v1322
        %v1324 = vlaneseq
        %v1325 = vshrl.u32 %v1324, 7
        %v1326 = vsub.s32 %v1323, %v1325
        %v1327 = vrot.slane %v1319, %v1326
        %v1329 = vunpack.c.l.s4 1983009808
        %v1330 = vunpack.c.0.s8 %v1329
        %v1331 = vlaneseq
        %v1332 = vshrl.u32 %v1331, 7
        %v1333 = vsub.s32 %v1330, %v1332
        %v1334 = vrot.slane %v1320, %v1333
        %v1335 = vcombine.low %v1311, %v1327
        %v1336 = vcombine.high %v1311, %v1327
        %v1338 = vunpack.c.l.s4 1934713408
        %v1339 = vunpack.c.0.s8 %v1338
        %v1340 = vlaneseq
        %v1341 = vshrl.u32 %v1340, 7
        %v1342 = vsub.s32 %v1339, %v1341
        %v1343 = vrot.slane %v1335, %v1342
        %v1345 = vunpack.c.l.s4 1934713408
        %v1346 = vunpack.c.0.s8 %v1345
        %v1347 = vlaneseq
        %v1348 = vshrl.u32 %v1347, 7
        %v1349 = vsub.s32 %v1346, %v1348
        %v1350 = vrot.slane %v1336, %v1349
        %v1351 = vcombine.low %v1318, %v1334
        %v1352 = vcombine.high %v1318, %v1334
        %v1354 = vunpack.c.l.s4 1934713408
        %v1355 = vunpack.c.0.s8 %v1354
        %v1356 = vlaneseq
        %v1357 = vshrl.u32 %v1356, 7
        %v1358 = vsub.s32 %v1355, %v1357
        %v1359 = vrot.slane %v1351, %v1358
        %v1361 = vunpack.c.l.s4 1934713408
        %v1362 = vunpack.c.0.s8 %v1361
        %v1363 = vlaneseq
        %v1364 = vshrl.u32 %v1363, 7
        %v1365 = vsub.s32 %v1362, %v1364
        %v1366 = vrot.slane %v1352, %v1365
        %v1367 = vcombine.high %v1343, 0.0
        %v1368 = vcombine.high %v1350, 0.0
        %v1369 = vcombine.high %v1359, 0.0
        %v1370 = vcombine.high %v1366, 0.0
        %v1371 = vcombine.low %v1343, %v1350
        %v1373 = vunpack.c.l.s4 1983009808
        %v1374 = vunpack.c.0.s8 %v1373
        %v1375 = vlaneseq
        %v1376 = vshrl.u32 %v1375, 7
        %v1377 = vsub.s32 %v1374, %v1376
        %v1378 = vrot.slane %v1371, %v1377
        %v1379 = vcombine.low %v1367, %v1368
        %v1381 = vunpack.c.l.s4 1983009808
        %v1382 = vunpack.c.0.s8 %v1381
        %v1383 = vlaneseq
        %v1384 = vshrl.u32 %v1383, 7
        %v1385 = vsub.s32 %v1382, %v1384
        %v1386 = vrot.slane %v1379, %v1385
        %v1387 = vcombine.low %v1359, %v1366
        %v1389 = vunpack.c.l.s4 1983009808
        %v1390 = vunpack.c.0.s8 %v1389
        %v1391 = vlaneseq
        %v1392 = vshrl.u32 %v1391, 7
        %v1393 = vsub.s32 %v1390, %v1392
        %v1394 = vrot.slane %v1387, %v1393
        %v1395 = vcombine.low %v1369, %v1370
        %v1397 = vunpack.c.l.s4 1983009808
        %v1398 = vunpack.c.0.s8 %v1397
        %v1399 = vlaneseq
        %v1400 = vshrl.u32 %v1399, 7
        %v1401 = vsub.s32 %v1398, %v1400
        %v1402 = vrot.slane %v1395, %v1401
        %v1403 = vcombine.low %v1378, %v1386
        %v1404 = vcombine.high %v1378, %v1386
        %v1406 = vunpack.c.l.s4 1934713408
        %v1407 = vunpack.c.0.s8 %v1406
        %v1408 = vlaneseq
        %v1409 = vshrl.u32 %v1408, 7
        %v1410 = vsub.s32 %v1407, %v1409
        %v1411 = vrot.slane %v1403, %v1410
        %v1413 = vunpack.c.l.s4 1934713408
        %v1414 = vunpack.c.0.s8 %v1413
        %v1415 = vlaneseq
        %v1416 = vshrl.u32 %v1415, 7
        %v1417 = vsub.s32 %v1414, %v1416
        %v1418 = vrot.slane %v1404, %v1417
        %v1419 = vcombine.low %v1394, %v1402
        %v1420 = vcombine.high %v1394, %v1402
        %v1422 = vunpack.c.l.s4 1934713408
        %v1423 = vunpack.c.0.s8 %v1422
        %v1424 = vlaneseq
        %v1425 = vshrl.u32 %v1424, 7
        %v1426 = vsub.s32 %v1423, %v1425
        %v1427 = vrot.slane %v1419, %v1426
        %v1429 = vunpack.c.l.s4 1934713408
        %v1430 = vunpack.c.0.s8 %v1429
        %v1431 = vlaneseq
        %v1432 = vshrl.u32 %v1431, 7
        %v1433 = vsub.s32 %v1430, %v1432
        %v1434 = vrot.slane %v1420, %v1433
        %v1435 = vcombine.low %v1411, %v1427
        %v1436 = vcombine.high %v1411, %v1427
        %v1437 = vcombine.low %v1418, %v1434
        %v1438 = vcombine.high %v1418, %v1434
        %v1439 = vpack.c.bf16 %v1435, %v1435
        %v1440 = vpack.c.bf16 %v1436, %v1436
        %v1441 = vpack.c.bf16 %v1437, %v1437
        %v1442 = vpack.c.bf16 %v1438, %v1438
        %1444 = vrot.lane.b32.xlu0 %v1176, 96
        %v1445 = vpop.permute.xlu0 %1444
        %1447 = vrot.lane.b32.xlu0 %v1176, 64
        %v1448 = vpop.permute.xlu0 %1447
        %1450 = vrot.lane.b32.xlu0 %v1176, 32
        %v1451 = vpop.permute.xlu0 %1450
        %v1453 = vcombine.low %v1176, %v1448
        %v1454 = vcombine.high %v1176, %v1448
        %v1456 = vunpack.c.l.s4 1983009808
        %v1457 = vunpack.c.0.s8 %v1456
        %v1458 = vlaneseq
        %v1459 = vshrl.u32 %v1458, 7
        %v1460 = vsub.s32 %v1457, %v1459
        %v1461 = vrot.slane %v1453, %v1460
        %v1463 = vunpack.c.l.s4 1983009808
        %v1464 = vunpack.c.0.s8 %v1463
        %v1465 = vlaneseq
        %v1466 = vshrl.u32 %v1465, 7
        %v1467 = vsub.s32 %v1464, %v1466
        %v1468 = vrot.slane %v1454, %v1467
        %v1469 = vcombine.low %v1445, %v1451
        %v1470 = vcombine.high %v1445, %v1451
        %v1472 = vunpack.c.l.s4 1983009808
        %v1473 = vunpack.c.0.s8 %v1472
        %v1474 = vlaneseq
        %v1475 = vshrl.u32 %v1474, 7
        %v1476 = vsub.s32 %v1473, %v1475
        %v1477 = vrot.slane %v1469, %v1476
        %v1479 = vunpack.c.l.s4 1983009808
        %v1480 = vunpack.c.0.s8 %v1479
        %v1481 = vlaneseq
        %v1482 = vshrl.u32 %v1481, 7
        %v1483 = vsub.s32 %v1480, %v1482
        %v1484 = vrot.slane %v1470, %v1483
        %v1485 = vcombine.low %v1461, %v1477
        %v1486 = vcombine.high %v1461, %v1477
        %v1488 = vunpack.c.l.s4 1934713408
        %v1489 = vunpack.c.0.s8 %v1488
        %v1490 = vlaneseq
        %v1491 = vshrl.u32 %v1490, 7
        %v1492 = vsub.s32 %v1489, %v1491
        %v1493 = vrot.slane %v1485, %v1492
        %v1495 = vunpack.c.l.s4 1934713408
        %v1496 = vunpack.c.0.s8 %v1495
        %v1497 = vlaneseq
        %v1498 = vshrl.u32 %v1497, 7
        %v1499 = vsub.s32 %v1496, %v1498
        %v1500 = vrot.slane %v1486, %v1499
        %v1501 = vcombine.low %v1468, %v1484
        %v1502 = vcombine.high %v1468, %v1484
        %v1504 = vunpack.c.l.s4 1934713408
        %v1505 = vunpack.c.0.s8 %v1504
        %v1506 = vlaneseq
        %v1507 = vshrl.u32 %v1506, 7
        %v1508 = vsub.s32 %v1505, %v1507
        %v1509 = vrot.slane %v1501, %v1508
        %v1511 = vunpack.c.l.s4 1934713408
        %v1512 = vunpack.c.0.s8 %v1511
        %v1513 = vlaneseq
        %v1514 = vshrl.u32 %v1513, 7
        %v1515 = vsub.s32 %v1512, %v1514
        %v1516 = vrot.slane %v1502, %v1515
        %v1517 = vcombine.high %v1493, 0.0
        %v1518 = vcombine.high %v1500, 0.0
        %v1519 = vcombine.high %v1509, 0.0
        %v1520 = vcombine.high %v1516, 0.0
        %v1521 = vcombine.low %v1493, %v1500
        %v1523 = vunpack.c.l.s4 1983009808
        %v1524 = vunpack.c.0.s8 %v1523
        %v1525 = vlaneseq
        %v1526 = vshrl.u32 %v1525, 7
        %v1527 = vsub.s32 %v1524, %v1526
        %v1528 = vrot.slane %v1521, %v1527
        %v1529 = vcombine.low %v1517, %v1518
        %v1531 = vunpack.c.l.s4 1983009808
        %v1532 = vunpack.c.0.s8 %v1531
        %v1533 = vlaneseq
        %v1534 = vshrl.u32 %v1533, 7
        %v1535 = vsub.s32 %v1532, %v1534
        %v1536 = vrot.slane %v1529, %v1535
        %v1537 = vcombine.low %v1509, %v1516
        %v1539 = vunpack.c.l.s4 1983009808
        %v1540 = vunpack.c.0.s8 %v1539
        %v1541 = vlaneseq
        %v1542 = vshrl.u32 %v1541, 7
        %v1543 = vsub.s32 %v1540, %v1542
        %v1544 = vrot.slane %v1537, %v1543
        %v1545 = vcombine.low %v1519, %v1520
        %v1547 = vunpack.c.l.s4 1983009808
        %v1548 = vunpack.c.0.s8 %v1547
        %v1549 = vlaneseq
        %v1550 = vshrl.u32 %v1549, 7
        %v1551 = vsub.s32 %v1548, %v1550
        %v1552 = vrot.slane %v1545, %v1551
        %v1553 = vcombine.low %v1528, %v1536
        %v1554 = vcombine.high %v1528, %v1536
        %v1556 = vunpack.c.l.s4 1934713408
        %v1557 = vunpack.c.0.s8 %v1556
        %v1558 = vlaneseq
        %v1559 = vshrl.u32 %v1558, 7
        %v1560 = vsub.s32 %v1557, %v1559
        %v1561 = vrot.slane %v1553, %v1560
        %v1563 = vunpack.c.l.s4 1934713408
        %v1564 = vunpack.c.0.s8 %v1563
        %v1565 = vlaneseq
        %v1566 = vshrl.u32 %v1565, 7
        %v1567 = vsub.s32 %v1564, %v1566
        %v1568 = vrot.slane %v1554, %v1567
        %v1569 = vcombine.low %v1544, %v1552
        %v1570 = vcombine.high %v1544, %v1552
        %v1572 = vunpack.c.l.s4 1934713408
        %v1573 = vunpack.c.0.s8 %v1572
        %v1574 = vlaneseq
        %v1575 = vshrl.u32 %v1574, 7
        %v1576 = vsub.s32 %v1573, %v1575
        %v1577 = vrot.slane %v1569, %v1576
        %v1579 = vunpack.c.l.s4 1934713408
        %v1580 = vunpack.c.0.s8 %v1579
        %v1581 = vlaneseq
        %v1582 = vshrl.u32 %v1581, 7
        %v1583 = vsub.s32 %v1580, %v1582
        %v1584 = vrot.slane %v1570, %v1583
        %v1585 = vcombine.low %v1561, %v1577
        %v1586 = vcombine.high %v1561, %v1577
        %v1587 = vcombine.low %v1568, %v1584
        %v1588 = vcombine.high %v1568, %v1584
        %v1589 = vpack.c.bf16 %v1585, %v1585
        %v1590 = vpack.c.bf16 %v1586, %v1586
        %v1591 = vpack.c.bf16 %v1587, %v1587
        %v1592 = vpack.c.bf16 %v1588, %v1588
        %1594 = vrot.lane.b32.xlu0 %v1287, 96
        %v1595 = vpop.permute.xlu0 %1594
        %1597 = vrot.lane.b32.xlu0 %v1287, 64
        %v1598 = vpop.permute.xlu0 %1597
        %1600 = vrot.lane.b32.xlu0 %v1287, 32
        %v1601 = vpop.permute.xlu0 %1600
        %v1603 = vcombine.low %v1287, %v1598
        %v1604 = vcombine.high %v1287, %v1598
        %v1606 = vunpack.c.l.s4 1983009808
        %v1607 = vunpack.c.0.s8 %v1606
        %v1608 = vlaneseq
        %v1609 = vshrl.u32 %v1608, 7
        %v1610 = vsub.s32 %v1607, %v1609
        %v1611 = vrot.slane %v1603, %v1610
        %v1613 = vunpack.c.l.s4 1983009808
        %v1614 = vunpack.c.0.s8 %v1613
        %v1615 = vlaneseq
        %v1616 = vshrl.u32 %v1615, 7
        %v1617 = vsub.s32 %v1614, %v1616
        %v1618 = vrot.slane %v1604, %v1617
        %v1619 = vcombine.low %v1595, %v1601
        %v1620 = vcombine.high %v1595, %v1601
        %v1622 = vunpack.c.l.s4 1983009808
        %v1623 = vunpack.c.0.s8 %v1622
        %v1624 = vlaneseq
        %v1625 = vshrl.u32 %v1624, 7
        %v1626 = vsub.s32 %v1623, %v1625
        %v1627 = vrot.slane %v1619, %v1626
        %v1629 = vunpack.c.l.s4 1983009808
        %v1630 = vunpack.c.0.s8 %v1629
        %v1631 = vlaneseq
        %v1632 = vshrl.u32 %v1631, 7
        %v1633 = vsub.s32 %v1630, %v1632
        %v1634 = vrot.slane %v1620, %v1633
        %v1635 = vcombine.low %v1611, %v1627
        %v1636 = vcombine.high %v1611, %v1627
        %v1638 = vunpack.c.l.s4 1934713408
        %v1639 = vunpack.c.0.s8 %v1638
        %v1640 = vlaneseq
        %v1641 = vshrl.u32 %v1640, 7
        %v1642 = vsub.s32 %v1639, %v1641
        %v1643 = vrot.slane %v1635, %v1642
        %v1645 = vunpack.c.l.s4 1934713408
        %v1646 = vunpack.c.0.s8 %v1645
        %v1647 = vlaneseq
        %v1648 = vshrl.u32 %v1647, 7
        %v1649 = vsub.s32 %v1646, %v1648
        %v1650 = vrot.slane %v1636, %v1649
        %v1651 = vcombine.low %v1618, %v1634
        %v1652 = vcombine.high %v1618, %v1634
        %v1654 = vunpack.c.l.s4 1934713408
        %v1655 = vunpack.c.0.s8 %v1654
        %v1656 = vlaneseq
        %v1657 = vshrl.u32 %v1656, 7
        %v1658 = vsub.s32 %v1655, %v1657
        %v1659 = vrot.slane %v1651, %v1658
        %v1661 = vunpack.c.l.s4 1934713408
        %v1662 = vunpack.c.0.s8 %v1661
        %v1663 = vlaneseq
        %v1664 = vshrl.u32 %v1663, 7
        %v1665 = vsub.s32 %v1662, %v1664
        %v1666 = vrot.slane %v1652, %v1665
        %v1667 = vcombine.high %v1643, 0.0
        %v1668 = vcombine.high %v1650, 0.0
        %v1669 = vcombine.high %v1659, 0.0
        %v1670 = vcombine.high %v1666, 0.0
        %v1671 = vcombine.low %v1643, %v1650
        %v1673 = vunpack.c.l.s4 1983009808
        %v1674 = vunpack.c.0.s8 %v1673
        %v1675 = vlaneseq
        %v1676 = vshrl.u32 %v1675, 7
        %v1677 = vsub.s32 %v1674, %v1676
        %v1678 = vrot.slane %v1671, %v1677
        %v1679 = vcombine.low %v1667, %v1668
        %v1681 = vunpack.c.l.s4 1983009808
        %v1682 = vunpack.c.0.s8 %v1681
        %v1683 = vlaneseq
        %v1684 = vshrl.u32 %v1683, 7
        %v1685 = vsub.s32 %v1682, %v1684
        %v1686 = vrot.slane %v1679, %v1685
        %v1687 = vcombine.low %v1659, %v1666
        %v1689 = vunpack.c.l.s4 1983009808
        %v1690 = vunpack.c.0.s8 %v1689
        %v1691 = vlaneseq
        %v1692 = vshrl.u32 %v1691, 7
        %v1693 = vsub.s32 %v1690, %v1692
        %v1694 = vrot.slane %v1687, %v1693
        %v1695 = vcombine.low %v1669, %v1670
        %v1697 = vunpack.c.l.s4 1983009808
        %v1698 = vunpack.c.0.s8 %v1697
        %v1699 = vlaneseq
        %v1700 = vshrl.u32 %v1699, 7
        %v1701 = vsub.s32 %v1698, %v1700
        %v1702 = vrot.slane %v1695, %v1701
        %v1703 = vcombine.low %v1678, %v1686
        %v1704 = vcombine.high %v1678, %v1686
        %v1706 = vunpack.c.l.s4 1934713408
        %v1707 = vunpack.c.0.s8 %v1706
        %v1708 = vlaneseq
        %v1709 = vshrl.u32 %v1708, 7
        %v1710 = vsub.s32 %v1707, %v1709
        %v1711 = vrot.slane %v1703, %v1710
        %v1713 = vunpack.c.l.s4 1934713408
        %v1714 = vunpack.c.0.s8 %v1713
        %v1715 = vlaneseq
        %v1716 = vshrl.u32 %v1715, 7
        %v1717 = vsub.s32 %v1714, %v1716
        %v1718 = vrot.slane %v1704, %v1717
        %v1719 = vcombine.low %v1694, %v1702
        %v1720 = vcombine.high %v1694, %v1702
        %v1722 = vunpack.c.l.s4 1934713408
        %v1723 = vunpack.c.0.s8 %v1722
        %v1724 = vlaneseq
        %v1725 = vshrl.u32 %v1724, 7
        %v1726 = vsub.s32 %v1723, %v1725
        %v1727 = vrot.slane %v1719, %v1726
        %v1729 = vunpack.c.l.s4 1934713408
        %v1730 = vunpack.c.0.s8 %v1729
        %v1731 = vlaneseq
        %v1732 = vshrl.u32 %v1731, 7
        %v1733 = vsub.s32 %v1730, %v1732
        %v1734 = vrot.slane %v1720, %v1733
        %v1735 = vcombine.low %v1711, %v1727
        %v1736 = vcombine.high %v1711, %v1727
        %v1737 = vcombine.low %v1718, %v1734
        %v1738 = vcombine.high %v1718, %v1734
        %v1739 = vpack.c.bf16 %v1735, %v1735
        %v1740 = vpack.c.bf16 %v1736, %v1736
        %v1741 = vpack.c.bf16 %v1737, %v1737
        %v1742 = vpack.c.bf16 %v1738, %v1738
        %vm1743 = vcmask 261120
        %v1745 = vsel %vm1743, %v1439, 0
        %v1748 = vsel %vm1743, %v1589, 0
        %1750 = vmatprep.subr.bf16.mxu0 0
        %1751 = vmatpush1.bf16.xpose.msra.mxu0 %v1748
        %1752 = vmatprep.subr.bf16.mxu0 0
        %1753 = vmatpush1.bf16.xpose.msra.mxu0 0
        %1754 = vmatprep.subr.bf16.mxu0 0
        %1755 = vmatpush1.bf16.xpose.msra.mxu0 0
        %1756 = vmatprep.subr.bf16.mxu0 0
        %1757 = vmatpush1.bf16.xpose.msra.mxu0 0
        %1758 = vmatprep.subr.bf16.mxu0 0
        %1759 = vmatpush1.bf16.xpose.msra.mxu0 0
        %1760 = vmatprep.subr.bf16.mxu0 0
        %1761 = vmatpush1.bf16.xpose.msra.mxu0 0
        %1762 = vmatprep.subr.bf16.mxu0 0
        %1763 = vmatpush1.bf16.xpose.msra.mxu0 0
        %1764 = vmatprep.subr.bf16.mxu0 0
        %1765 = vmatpush1.bf16.xpose.msra.mxu0 0
        %1766 = vmatprep.subr.bf16.mxu0 0
        %1767 = vmatpush1.bf16.xpose.msra.mxu0 0
        %1768 = vmatprep.subr.bf16.mxu0 0
        %1769 = vmatpush1.bf16.xpose.msra.mxu0 0
        %1770 = vmatprep.subr.bf16.mxu0 0
        %1771 = vmatpush1.bf16.xpose.msra.mxu0 0
        %1772 = vmatprep.subr.bf16.mxu0 0
        %1773 = vmatpush1.bf16.xpose.msra.mxu0 0
        %1774 = vmatprep.subr.bf16.mxu0 0
        %1775 = vmatpush1.bf16.xpose.msra.mxu0 0
        %1776 = vmatprep.subr.bf16.mxu0 0
        %1777 = vmatpush1.bf16.xpose.msra.mxu0 0
        %1778 = vmatprep.subr.bf16.mxu0 0
        %1779 = vmatpush1.bf16.xpose.msra.mxu0 0
        %1780 = vmatprep.subr.bf16.mxu0 0
        %1781 = vmatpush1.bf16.xpose.msra.mxu0 0
        %1782 = vmatprep.mubr.bf16.mxu0 0
        %1783 = vmatmul.mubr.bf16.gmra.mrb[0].mxu0 %v1745
        %v1784 = vpop.f32.mrb[0].mxu0
        %v1785 = vadd.f32 0.0, %v1784
        %v1786 = vpop.f32.mrb[0].mxu0
        %v1787 = vpop.f32.mrb[0].mxu0
        %v1788 = vpop.f32.mrb[0].mxu0
        %1789 = vdwg.mxu0
        %v1791 = vsel %vm1743, %v1440, 0
        %v1794 = vsel %vm1743, %v1590, 0
        %1796 = vmatprep.subr.bf16.mxu0 0
        %1797 = vmatpush1.bf16.xpose.msra.mxu0 %v1794
        %1798 = vmatprep.subr.bf16.mxu0 0
        %1799 = vmatpush1.bf16.xpose.msra.mxu0 0
        %1800 = vmatprep.subr.bf16.mxu0 0
        %1801 = vmatpush1.bf16.xpose.msra.mxu0 0
        %1802 = vmatprep.subr.bf16.mxu0 0
        %1803 = vmatpush1.bf16.xpose.msra.mxu0 0
        %1804 = vmatprep.subr.bf16.mxu0 0
        %1805 = vmatpush1.bf16.xpose.msra.mxu0 0
        %1806 = vmatprep.subr.bf16.mxu0 0
        %1807 = vmatpush1.bf16.xpose.msra.mxu0 0
        %1808 = vmatprep.subr.bf16.mxu0 0
        %1809 = vmatpush1.bf16.xpose.msra.mxu0 0
        %1810 = vmatprep.subr.bf16.mxu0 0
        %1811 = vmatpush1.bf16.xpose.msra.mxu0 0
        %1812 = vmatprep.subr.bf16.mxu0 0
        %1813 = vmatpush1.bf16.xpose.msra.mxu0 0
        %1814 = vmatprep.subr.bf16.mxu0 0
        %1815 = vmatpush1.bf16.xpose.msra.mxu0 0
        %1816 = vmatprep.subr.bf16.mxu0 0
        %1817 = vmatpush1.bf16.xpose.msra.mxu0 0
        %1818 = vmatprep.subr.bf16.mxu0 0
        %1819 = vmatpush1.bf16.xpose.msra.mxu0 0
        %1820 = vmatprep.subr.bf16.mxu0 0
        %1821 = vmatpush1.bf16.xpose.msra.mxu0 0
        %1822 = vmatprep.subr.bf16.mxu0 0
        %1823 = vmatpush1.bf16.xpose.msra.mxu0 0
        %1824 = vmatprep.subr.bf16.mxu0 0
        %1825 = vmatpush1.bf16.xpose.msra.mxu0 0
        %1826 = vmatprep.subr.bf16.mxu0 0
        %1827 = vmatpush1.bf16.xpose.msra.mxu0 0
        %1828 = vmatprep.mubr.bf16.mxu0 0
        %1829 = vmatmul.mubr.bf16.gmra.mrb[0].mxu0 %v1791
        %v1830 = vpop.f32.mrb[0].mxu0
        %v1831 = vadd.f32 0.0, %v1830
        %v1832 = vpop.f32.mrb[0].mxu0
        %v1833 = vpop.f32.mrb[0].mxu0
        %v1834 = vpop.f32.mrb[0].mxu0
        %1835 = vdwg.mxu0
        %v1837 = vsel %vm1743, %v1441, 0
        %v1840 = vsel %vm1743, %v1591, 0
        %1842 = vmatprep.subr.bf16.mxu0 0
        %1843 = vmatpush1.bf16.xpose.msra.mxu0 %v1840
        %1844 = vmatprep.subr.bf16.mxu0 0
        %1845 = vmatpush1.bf16.xpose.msra.mxu0 0
        %1846 = vmatprep.subr.bf16.mxu0 0
        %1847 = vmatpush1.bf16.xpose.msra.mxu0 0
        %1848 = vmatprep.subr.bf16.mxu0 0
        %1849 = vmatpush1.bf16.xpose.msra.mxu0 0
        %1850 = vmatprep.subr.bf16.mxu0 0
        %1851 = vmatpush1.bf16.xpose.msra.mxu0 0
        %1852 = vmatprep.subr.bf16.mxu0 0
        %1853 = vmatpush1.bf16.xpose.msra.mxu0 0
        %1854 = vmatprep.subr.bf16.mxu0 0
        %1855 = vmatpush1.bf16.xpose.msra.mxu0 0
        %1856 = vmatprep.subr.bf16.mxu0 0
        %1857 = vmatpush1.bf16.xpose.msra.mxu0 0
        %1858 = vmatprep.subr.bf16.mxu0 0
        %1859 = vmatpush1.bf16.xpose.msra.mxu0 0
        %1860 = vmatprep.subr.bf16.mxu0 0
        %1861 = vmatpush1.bf16.xpose.msra.mxu0 0
        %1862 = vmatprep.subr.bf16.mxu0 0
        %1863 = vmatpush1.bf16.xpose.msra.mxu0 0
        %1864 = vmatprep.subr.bf16.mxu0 0
        %1865 = vmatpush1.bf16.xpose.msra.mxu0 0
        %1866 = vmatprep.subr.bf16.mxu0 0
        %1867 = vmatpush1.bf16.xpose.msra.mxu0 0
        %1868 = vmatprep.subr.bf16.mxu0 0
        %1869 = vmatpush1.bf16.xpose.msra.mxu0 0
        %1870 = vmatprep.subr.bf16.mxu0 0
        %1871 = vmatpush1.bf16.xpose.msra.mxu0 0
        %1872 = vmatprep.subr.bf16.mxu0 0
        %1873 = vmatpush1.bf16.xpose.msra.mxu0 0
        %1874 = vmatprep.mubr.bf16.mxu0 0
        %1875 = vmatmul.mubr.bf16.gmra.mrb[0].mxu0 %v1837
        %v1876 = vpop.f32.mrb[0].mxu0
        %v1877 = vadd.f32 0.0, %v1876
        %v1878 = vpop.f32.mrb[0].mxu0
        %v1879 = vpop.f32.mrb[0].mxu0
        %v1880 = vpop.f32.mrb[0].mxu0
        %1881 = vdwg.mxu0
        %v1883 = vsel %vm1743, %v1442, 0
        %v1886 = vsel %vm1743, %v1592, 0
        %1888 = vmatprep.subr.bf16.mxu0 0
        %1889 = vmatpush1.bf16.xpose.msra.mxu0 %v1886
        %1890 = vmatprep.subr.bf16.mxu0 0
        %1891 = vmatpush1.bf16.xpose.msra.mxu0 0
        %1892 = vmatprep.subr.bf16.mxu0 0
        %1893 = vmatpush1.bf16.xpose.msra.mxu0 0
        %1894 = vmatprep.subr.bf16.mxu0 0
        %1895 = vmatpush1.bf16.xpose.msra.mxu0 0
        %1896 = vmatprep.subr.bf16.mxu0 0
        %1897 = vmatpush1.bf16.xpose.msra.mxu0 0
        %1898 = vmatprep.subr.bf16.mxu0 0
        %1899 = vmatpush1.bf16.xpose.msra.mxu0 0
        %1900 = vmatprep.subr.bf16.mxu0 0
        %1901 = vmatpush1.bf16.xpose.msra.mxu0 0
        %1902 = vmatprep.subr.bf16.mxu0 0
        %1903 = vmatpush1.bf16.xpose.msra.mxu0 0
        %1904 = vmatprep.subr.bf16.mxu0 0
        %1905 = vmatpush1.bf16.xpose.msra.mxu0 0
        %1906 = vmatprep.subr.bf16.mxu0 0
        %1907 = vmatpush1.bf16.xpose.msra.mxu0 0
        %1908 = vmatprep.subr.bf16.mxu0 0
        %1909 = vmatpush1.bf16.xpose.msra.mxu0 0
        %1910 = vmatprep.subr.bf16.mxu0 0
        %1911 = vmatpush1.bf16.xpose.msra.mxu0 0
        %1912 = vmatprep.subr.bf16.mxu0 0
        %1913 = vmatpush1.bf16.xpose.msra.mxu0 0
        %1914 = vmatprep.subr.bf16.mxu0 0
        %1915 = vmatpush1.bf16.xpose.msra.mxu0 0
        %1916 = vmatprep.subr.bf16.mxu0 0
        %1917 = vmatpush1.bf16.xpose.msra.mxu0 0
        %1918 = vmatprep.subr.bf16.mxu0 0
        %1919 = vmatpush1.bf16.xpose.msra.mxu0 0
        %1920 = vmatprep.mubr.bf16.mxu0 0
        %1921 = vmatmul.mubr.bf16.gmra.mrb[0].mxu0 %v1883
        %v1922 = vpop.f32.mrb[0].mxu0
        %v1923 = vadd.f32 0.0, %v1922
        %v1924 = vpop.f32.mrb[0].mxu0
        %v1925 = vpop.f32.mrb[0].mxu0
        %v1926 = vpop.f32.mrb[0].mxu0
        %1927 = vdwg.mxu0
        %vm1928 = vcmask 64512
        %v1929 = vsel %vm1928, %v1785, -inf
        %1930 = vmax.xlane.f32.xlu0 %v1929
        %v1931 = vpop.xlane.xlu0 %1930
        %v1932 = vsel %vm1928, %v1831, -inf
        %1933 = vmax.xlane.f32.xlu0 %v1932
        %v1934 = vpop.xlane.xlu0 %1933
        %v1935 = vsel %vm1928, %v1877, -inf
        %1936 = vmax.xlane.f32.xlu0 %v1935
        %v1937 = vpop.xlane.xlu0 %1936
        %v1938 = vsel %vm1928, %v1923, -inf
        %1939 = vmax.xlane.f32.xlu0 %v1938
        %v1940 = vpop.xlane.xlu0 %1939
        %v1941 = vsub.f32 %v1785, %v1931
        %v1942 = vsub.f32 %v1831, %v1934
        %v1943 = vsub.f32 %v1877, %v1937
        %v1944 = vsub.f32 %v1923, %v1940
        %v1945 = vmul.f32 %v1941, 1.442695
        %v1946 = vpow.pop %v1945
        %v1947 = vmul.f32 %v1942, 1.442695
        %v1948 = vpow.pop %v1947
        %v1949 = vmul.f32 %v1943, 1.442695
        %v1950 = vpow.pop %v1949
        %v1951 = vmul.f32 %v1944, 1.442695
        %v1952 = vpow.pop %v1951
        %v1953 = vsel %vm1928, %v1946, 0.0
        %1954 = vadd.xlane.f32.xlu0 %v1953
        %v1955 = vpop.xlane.xlu0 %1954
        %v1956 = vsel %vm1928, %v1948, 0.0
        %1957 = vadd.xlane.f32.xlu0 %v1956
        %v1958 = vpop.xlane.xlu0 %1957
        %v1959 = vsel %vm1928, %v1950, 0.0
        %1960 = vadd.xlane.f32.xlu0 %v1959
        %v1961 = vpop.xlane.xlu0 %1960
        %v1962 = vsel %vm1928, %v1952, 0.0
        %1963 = vadd.xlane.f32.xlu0 %v1962
        %v1964 = vpop.xlane.xlu0 %1963
        %v1965 = vrcp.pop %v1955
        %v1966 = vrcp.pop %v1958
        %v1967 = vrcp.pop %v1961
        %v1968 = vrcp.pop %v1964
        %v1969 = vmul.f32 %v1946, %v1965
        %v1970 = vmul.f32 %v1948, %v1966
        %v1971 = vmul.f32 %v1950, %v1967
        %v1972 = vmul.f32 %v1952, %v1968
        %v1973 = vpack.c.bf16 %v1969, %v1969
        %v1974 = vpack.c.bf16 %v1970, %v1970
        %v1975 = vpack.c.bf16 %v1971, %v1971
        %v1976 = vpack.c.bf16 %v1972, %v1972
        %v1978 = vsel %vm1928, %v1973, 0
        %vm1980 = vcmask 1043456
        %v1982 = vsel %vm1980, %v1739, 0
        %1984 = vmatprep.subr.bf16.mxu0 0
        %1985 = vmatpush1.bf16.msra.mxu0 %v1982
        %1986 = vmatprep.subr.bf16.mxu0 0
        %1987 = vmatpush1.bf16.msra.mxu0 0
        %1988 = vmatprep.subr.bf16.mxu0 0
        %1989 = vmatpush1.bf16.msra.mxu0 0
        %1990 = vmatprep.subr.bf16.mxu0 0
        %1991 = vmatpush1.bf16.msra.mxu0 0
        %1992 = vmatprep.subr.bf16.mxu0 0
        %1993 = vmatpush1.bf16.msra.mxu0 0
        %1994 = vmatprep.subr.bf16.mxu0 0
        %1995 = vmatpush1.bf16.msra.mxu0 0
        %1996 = vmatprep.subr.bf16.mxu0 0
        %1997 = vmatpush1.bf16.msra.mxu0 0
        %1998 = vmatprep.subr.bf16.mxu0 0
        %1999 = vmatpush1.bf16.msra.mxu0 0
        %2000 = vmatprep.subr.bf16.mxu0 0
        %2001 = vmatpush1.bf16.msra.mxu0 0
        %2002 = vmatprep.subr.bf16.mxu0 0
        %2003 = vmatpush1.bf16.msra.mxu0 0
        %2004 = vmatprep.subr.bf16.mxu0 0
        %2005 = vmatpush1.bf16.msra.mxu0 0
        %2006 = vmatprep.subr.bf16.mxu0 0
        %2007 = vmatpush1.bf16.msra.mxu0 0
        %2008 = vmatprep.subr.bf16.mxu0 0
        %2009 = vmatpush1.bf16.msra.mxu0 0
        %2010 = vmatprep.subr.bf16.mxu0 0
        %2011 = vmatpush1.bf16.msra.mxu0 0
        %2012 = vmatprep.subr.bf16.mxu0 0
        %2013 = vmatpush1.bf16.msra.mxu0 0
        %2014 = vmatprep.subr.bf16.mxu0 0
        %2015 = vmatpush1.bf16.msra.mxu0 0
        %2016 = vmatprep.mubr.bf16.mxu0 0
        %2017 = vmatmul.mubr.bf16.gmra.mrb[0].mxu0 %v1978
        %v2018 = vpop.f32.mrb[0].mxu0
        %v2019 = vadd.f32 0.0, %v2018
        %v2020 = vpop.f32.mrb[0].mxu0
        %v2021 = vpop.f32.mrb[0].mxu0
        %v2022 = vpop.f32.mrb[0].mxu0
        %2023 = vdwg.mxu0
        %v2025 = vsel %vm1928, %v1974, 0
        %v2028 = vsel %vm1980, %v1740, 0
        %2030 = vmatprep.subr.bf16.mxu0 0
        %2031 = vmatpush1.bf16.msra.mxu0 %v2028
        %2032 = vmatprep.subr.bf16.mxu0 0
        %2033 = vmatpush1.bf16.msra.mxu0 0
        %2034 = vmatprep.subr.bf16.mxu0 0
        %2035 = vmatpush1.bf16.msra.mxu0 0
        %2036 = vmatprep.subr.bf16.mxu0 0
        %2037 = vmatpush1.bf16.msra.mxu0 0
        %2038 = vmatprep.subr.bf16.mxu0 0
        %2039 = vmatpush1.bf16.msra.mxu0 0
        %2040 = vmatprep.subr.bf16.mxu0 0
        %2041 = vmatpush1.bf16.msra.mxu0 0
        %2042 = vmatprep.subr.bf16.mxu0 0
        %2043 = vmatpush1.bf16.msra.mxu0 0
        %2044 = vmatprep.subr.bf16.mxu0 0
        %2045 = vmatpush1.bf16.msra.mxu0 0
        %2046 = vmatprep.subr.bf16.mxu0 0
        %2047 = vmatpush1.bf16.msra.mxu0 0
        %2048 = vmatprep.subr.bf16.mxu0 0
        %2049 = vmatpush1.bf16.msra.mxu0 0
        %2050 = vmatprep.subr.bf16.mxu0 0
        %2051 = vmatpush1.bf16.msra.mxu0 0
        %2052 = vmatprep.subr.bf16.mxu0 0
        %2053 = vmatpush1.bf16.msra.mxu0 0
        %2054 = vmatprep.subr.bf16.mxu0 0
        %2055 = vmatpush1.bf16.msra.mxu0 0
        %2056 = vmatprep.subr.bf16.mxu0 0
        %2057 = vmatpush1.bf16.msra.mxu0 0
        %2058 = vmatprep.subr.bf16.mxu0 0
        %2059 = vmatpush1.bf16.msra.mxu0 0
        %2060 = vmatprep.subr.bf16.mxu0 0
        %2061 = vmatpush1.bf16.msra.mxu0 0
        %2062 = vmatprep.mubr.bf16.mxu0 0
        %2063 = vmatmul.mubr.bf16.gmra.mrb[0].mxu0 %v2025
        %v2064 = vpop.f32.mrb[0].mxu0
        %v2065 = vadd.f32 0.0, %v2064
        %v2066 = vpop.f32.mrb[0].mxu0
        %v2067 = vpop.f32.mrb[0].mxu0
        %v2068 = vpop.f32.mrb[0].mxu0
        %2069 = vdwg.mxu0
        %v2071 = vsel %vm1928, %v1975, 0
        %v2074 = vsel %vm1980, %v1741, 0
        %2076 = vmatprep.subr.bf16.mxu0 0
        %2077 = vmatpush1.bf16.msra.mxu0 %v2074
        %2078 = vmatprep.subr.bf16.mxu0 0
        %2079 = vmatpush1.bf16.msra.mxu0 0
        %2080 = vmatprep.subr.bf16.mxu0 0
        %2081 = vmatpush1.bf16.msra.mxu0 0
        %2082 = vmatprep.subr.bf16.mxu0 0
        %2083 = vmatpush1.bf16.msra.mxu0 0
        %2084 = vmatprep.subr.bf16.mxu0 0
        %2085 = vmatpush1.bf16.msra.mxu0 0
        %2086 = vmatprep.subr.bf16.mxu0 0
        %2087 = vmatpush1.bf16.msra.mxu0 0
        %2088 = vmatprep.subr.bf16.mxu0 0
        %2089 = vmatpush1.bf16.msra.mxu0 0
        %2090 = vmatprep.subr.bf16.mxu0 0
        %2091 = vmatpush1.bf16.msra.mxu0 0
        %2092 = vmatprep.subr.bf16.mxu0 0
        %2093 = vmatpush1.bf16.msra.mxu0 0
        %2094 = vmatprep.subr.bf16.mxu0 0
        %2095 = vmatpush1.bf16.msra.mxu0 0
        %2096 = vmatprep.subr.bf16.mxu0 0
        %2097 = vmatpush1.bf16.msra.mxu0 0
        %2098 = vmatprep.subr.bf16.mxu0 0
        %2099 = vmatpush1.bf16.msra.mxu0 0
        %2100 = vmatprep.subr.bf16.mxu0 0
        %2101 = vmatpush1.bf16.msra.mxu0 0
        %2102 = vmatprep.subr.bf16.mxu0 0
        %2103 = vmatpush1.bf16.msra.mxu0 0
        %2104 = vmatprep.subr.bf16.mxu0 0
        %2105 = vmatpush1.bf16.msra.mxu0 0
        %2106 = vmatprep.subr.bf16.mxu0 0
        %2107 = vmatpush1.bf16.msra.mxu0 0
        %2108 = vmatprep.mubr.bf16.mxu0 0
        %2109 = vmatmul.mubr.bf16.gmra.mrb[0].mxu0 %v2071
        %v2110 = vpop.f32.mrb[0].mxu0
        %v2111 = vadd.f32 0.0, %v2110
        %v2112 = vpop.f32.mrb[0].mxu0
        %v2113 = vpop.f32.mrb[0].mxu0
        %v2114 = vpop.f32.mrb[0].mxu0
        %2115 = vdwg.mxu0
        %v2117 = vsel %vm1928, %v1976, 0
        %v2120 = vsel %vm1980, %v1742, 0
        %2122 = vmatprep.subr.bf16.mxu0 0
        %2123 = vmatpush1.bf16.msra.mxu0 %v2120
        %2124 = vmatprep.subr.bf16.mxu0 0
        %2125 = vmatpush1.bf16.msra.mxu0 0
        %2126 = vmatprep.subr.bf16.mxu0 0
        %2127 = vmatpush1.bf16.msra.mxu0 0
        %2128 = vmatprep.subr.bf16.mxu0 0
        %2129 = vmatpush1.bf16.msra.mxu0 0
        %2130 = vmatprep.subr.bf16.mxu0 0
        %2131 = vmatpush1.bf16.msra.mxu0 0
        %2132 = vmatprep.subr.bf16.mxu0 0
        %2133 = vmatpush1.bf16.msra.mxu0 0
        %2134 = vmatprep.subr.bf16.mxu0 0
        %2135 = vmatpush1.bf16.msra.mxu0 0
        %2136 = vmatprep.subr.bf16.mxu0 0
        %2137 = vmatpush1.bf16.msra.mxu0 0
        %2138 = vmatprep.subr.bf16.mxu0 0
        %2139 = vmatpush1.bf16.msra.mxu0 0
        %2140 = vmatprep.subr.bf16.mxu0 0
        %2141 = vmatpush1.bf16.msra.mxu0 0
        %2142 = vmatprep.subr.bf16.mxu0 0
        %2143 = vmatpush1.bf16.msra.mxu0 0
        %2144 = vmatprep.subr.bf16.mxu0 0
        %2145 = vmatpush1.bf16.msra.mxu0 0
        %2146 = vmatprep.subr.bf16.mxu0 0
        %2147 = vmatpush1.bf16.msra.mxu0 0
        %2148 = vmatprep.subr.bf16.mxu0 0
        %2149 = vmatpush1.bf16.msra.mxu0 0
        %2150 = vmatprep.subr.bf16.mxu0 0
        %2151 = vmatpush1.bf16.msra.mxu0 0
        %2152 = vmatprep.subr.bf16.mxu0 0
        %2153 = vmatpush1.bf16.msra.mxu0 0
        %2154 = vmatprep.mubr.bf16.mxu0 0
        %2155 = vmatmul.mubr.bf16.gmra.mrb[0].mxu0 %v2117
        %v2156 = vpop.f32.mrb[0].mxu0
        %v2157 = vadd.f32 0.0, %v2156
        %v2158 = vpop.f32.mrb[0].mxu0
        %v2159 = vpop.f32.mrb[0].mxu0
        %v2160 = vpop.f32.mrb[0].mxu0
        %2161 = vdwg.mxu0
        %v2162 = vcombine.low %v2019, %v2111
        %v2163 = vcombine.high %v2019, %v2111
        %v2165 = vunpack.c.l.s4 1983009808
        %v2166 = vunpack.c.0.s8 %v2165
        %v2167 = vlaneseq
        %v2168 = vshrl.u32 %v2167, 7
        %v2169 = vsub.s32 %v2166, %v2168
        %v2170 = vrot.slane %v2162, %v2169
        %v2172 = vunpack.c.l.s4 1983009808
        %v2173 = vunpack.c.0.s8 %v2172
        %v2174 = vlaneseq
        %v2175 = vshrl.u32 %v2174, 7
        %v2176 = vsub.s32 %v2173, %v2175
        %v2177 = vrot.slane %v2163, %v2176
        %v2178 = vcombine.low %v2065, %v2157
        %v2179 = vcombine.high %v2065, %v2157
        %v2181 = vunpack.c.l.s4 1983009808
        %v2182 = vunpack.c.0.s8 %v2181
        %v2183 = vlaneseq
        %v2184 = vshrl.u32 %v2183, 7
        %v2185 = vsub.s32 %v2182, %v2184
        %v2186 = vrot.slane %v2178, %v2185
        %v2188 = vunpack.c.l.s4 1983009808
        %v2189 = vunpack.c.0.s8 %v2188
        %v2190 = vlaneseq
        %v2191 = vshrl.u32 %v2190, 7
        %v2192 = vsub.s32 %v2189, %v2191
        %v2193 = vrot.slane %v2179, %v2192
        %v2194 = vcombine.low %v2170, %v2186
        %v2195 = vcombine.high %v2170, %v2186
        %v2197 = vunpack.c.l.s4 1934713408
        %v2198 = vunpack.c.0.s8 %v2197
        %v2199 = vlaneseq
        %v2200 = vshrl.u32 %v2199, 7
        %v2201 = vsub.s32 %v2198, %v2200
        %v2202 = vrot.slane %v2194, %v2201
        %v2204 = vunpack.c.l.s4 1934713408
        %v2205 = vunpack.c.0.s8 %v2204
        %v2206 = vlaneseq
        %v2207 = vshrl.u32 %v2206, 7
        %v2208 = vsub.s32 %v2205, %v2207
        %v2209 = vrot.slane %v2195, %v2208
        %v2210 = vcombine.low %v2177, %v2193
        %v2211 = vcombine.high %v2177, %v2193
        %v2213 = vunpack.c.l.s4 1934713408
        %v2214 = vunpack.c.0.s8 %v2213
        %v2215 = vlaneseq
        %v2216 = vshrl.u32 %v2215, 7
        %v2217 = vsub.s32 %v2214, %v2216
        %v2218 = vrot.slane %v2210, %v2217
        %v2220 = vunpack.c.l.s4 1934713408
        %v2221 = vunpack.c.0.s8 %v2220
        %v2222 = vlaneseq
        %v2223 = vshrl.u32 %v2222, 7
        %v2224 = vsub.s32 %v2221, %v2223
        %v2225 = vrot.slane %v2211, %v2224
        %v2226 = vcombine.high %v2202, 0.0
        %v2227 = vcombine.high %v2209, 0.0
        %v2228 = vcombine.high %v2218, 0.0
        %v2229 = vcombine.high %v2225, 0.0
        %v2230 = vcombine.low %v2202, %v2209
        %v2232 = vunpack.c.l.s4 1983009808
        %v2233 = vunpack.c.0.s8 %v2232
        %v2234 = vlaneseq
        %v2235 = vshrl.u32 %v2234, 7
        %v2236 = vsub.s32 %v2233, %v2235
        %v2237 = vrot.slane %v2230, %v2236
        %v2238 = vcombine.low %v2226, %v2227
        %v2240 = vunpack.c.l.s4 1983009808
        %v2241 = vunpack.c.0.s8 %v2240
        %v2242 = vlaneseq
        %v2243 = vshrl.u32 %v2242, 7
        %v2244 = vsub.s32 %v2241, %v2243
        %v2245 = vrot.slane %v2238, %v2244
        %v2246 = vcombine.low %v2218, %v2225
        %v2248 = vunpack.c.l.s4 1983009808
        %v2249 = vunpack.c.0.s8 %v2248
        %v2250 = vlaneseq
        %v2251 = vshrl.u32 %v2250, 7
        %v2252 = vsub.s32 %v2249, %v2251
        %v2253 = vrot.slane %v2246, %v2252
        %v2254 = vcombine.low %v2228, %v2229
        %v2256 = vunpack.c.l.s4 1983009808
        %v2257 = vunpack.c.0.s8 %v2256
        %v2258 = vlaneseq
        %v2259 = vshrl.u32 %v2258, 7
        %v2260 = vsub.s32 %v2257, %v2259
        %v2261 = vrot.slane %v2254, %v2260
        %v2262 = vcombine.low %v2237, %v2245
        %v2263 = vcombine.high %v2237, %v2245
        %v2265 = vunpack.c.l.s4 1934713408
        %v2266 = vunpack.c.0.s8 %v2265
        %v2267 = vlaneseq
        %v2268 = vshrl.u32 %v2267, 7
        %v2269 = vsub.s32 %v2266, %v2268
        %v2270 = vrot.slane %v2262, %v2269
        %v2272 = vunpack.c.l.s4 1934713408
        %v2273 = vunpack.c.0.s8 %v2272
        %v2274 = vlaneseq
        %v2275 = vshrl.u32 %v2274, 7
        %v2276 = vsub.s32 %v2273, %v2275
        %v2277 = vrot.slane %v2263, %v2276
        %v2278 = vcombine.low %v2253, %v2261
        %v2279 = vcombine.high %v2253, %v2261
        %v2281 = vunpack.c.l.s4 1934713408
        %v2282 = vunpack.c.0.s8 %v2281
        %v2283 = vlaneseq
        %v2284 = vshrl.u32 %v2283, 7
        %v2285 = vsub.s32 %v2282, %v2284
        %v2286 = vrot.slane %v2278, %v2285
        %v2288 = vunpack.c.l.s4 1934713408
        %v2289 = vunpack.c.0.s8 %v2288
        %v2290 = vlaneseq
        %v2291 = vshrl.u32 %v2290, 7
        %v2292 = vsub.s32 %v2289, %v2291
        %v2293 = vrot.slane %v2279, %v2292
        %v2294 = vcombine.low %v2270, %v2286
        %v2295 = vcombine.high %v2270, %v2286
        %v2296 = vcombine.low %v2277, %v2293
        %v2297 = vcombine.high %v2277, %v2293
        %2299 = vrot.lane.b32.xlu0 %v2295, 32
        %v2300 = vpop.permute.xlu0 %2299
        %2303 = vrot.lane.b32.xlu0 %v2296, 64
        %v2304 = vpop.permute.xlu0 %2303
        %2307 = vrot.lane.b32.xlu0 %v2297, 96
        %v2308 = vpop.permute.xlu0 %2307
        %v2310 = vsel %vm1743, %v2294, %v2300
        %vm2311 = vcmask 523264
        %v2312 = vsel %vm2311, %v2310, %v2304
        %vm2313 = vcmask 785408
        %v2314 = vsel %vm2313, %v2312, %v2308
        %v2315 = vpack.c.bf16 %v2314, %v2314
        %v2316 = vld [vmem:[%s789] sm:$0xf]
        %v2317 = vld [vmem:[%s789 + $0x4] sm:$0xf]
        %v2318 = vld [vmem:[%s789 + $0x8] sm:$0xf]
        %v2319 = vld [vmem:[%s789 + $0xc] sm:$0xf]
        %v2320 = vld [vmem:[%s789 + $0x10] sm:$0xf]
        %v2321 = vld [vmem:[%s789 + $0x14] sm:$0xf]
        %v2322 = vld [vmem:[%s789 + $0x18] sm:$0xf]
        %v2323 = vld [vmem:[%s789 + $0x1c] sm:$0xf]
        %v2324 = vld [vmem:[%s789 + $0x20] sm:$0xf]
        %v2325 = vld [vmem:[%s789 + $0x24] sm:$0xf]
        %v2326 = vld [vmem:[%s789 + $0x28] sm:$0xf]
        %v2327 = vld [vmem:[%s789 + $0x2c] sm:$0xf]
        %v2328 = vld [vmem:[%s789 + $0x30] sm:$0xf]
        %v2329 = vld [vmem:[%s789 + $0x34] sm:$0xf]
        %v2330 = vld [vmem:[%s789 + $0x38] sm:$0xf]
        %v2331 = vld [vmem:[%s789 + $0x3c] sm:$0xf]
        %v2332 = vld [vmem:[%s930] sm:$0x1]
        %v2334 = vlaneseq
        %v2335 = vshrl.u32 %v2334, 7
        %v2336 = vsub.s32 0, %v2335
        %v2337 = vrot.slane %v2332, %v2336
        %v2355 = vunpack.c.l.b16 %v2316
        %v2356 = vunpack.c.l.b16 %v2317
        %v2357 = vunpack.c.l.b16 %v2318
        %v2358 = vunpack.c.l.b16 %v2319
        %v2359 = vunpack.c.l.b16 %v2320
        %v2360 = vunpack.c.l.b16 %v2321
        %v2361 = vunpack.c.l.b16 %v2322
        %v2362 = vunpack.c.l.b16 %v2323
        %v2363 = vunpack.c.l.b16 %v2324
        %v2364 = vunpack.c.l.b16 %v2325
        %v2365 = vunpack.c.l.b16 %v2326
        %v2366 = vunpack.c.l.b16 %v2327
        %v2367 = vunpack.c.l.b16 %v2328
        %v2368 = vunpack.c.l.b16 %v2329
        %v2369 = vunpack.c.l.b16 %v2330
        %v2370 = vunpack.c.l.b16 %v2331
        %v2371 = vpack.c.b16 %v2356, %v2355
        %v2372 = vpack.c.b16 %v2358, %v2357
        %v2373 = vpack.c.b16 %v2360, %v2359
        %v2374 = vpack.c.b16 %v2362, %v2361
        %v2375 = vpack.c.b16 %v2364, %v2363
        %v2376 = vpack.c.b16 %v2366, %v2365
        %v2377 = vpack.c.b16 %v2368, %v2367
        %v2378 = vpack.c.b16 %v2370, %v2369
        %2387 = vmatprep.subr.bf16.mxu0 0
        %2388 = vmatpush1.bf16.msra.mxu0 %v2371
        %2389 = vmatprep.subr.bf16.mxu0 0
        %2390 = vmatpush1.bf16.msra.mxu0 %v2372
        %2391 = vmatprep.subr.bf16.mxu0 0
        %2392 = vmatpush1.bf16.msra.mxu0 %v2373
        %2393 = vmatprep.subr.bf16.mxu0 0
        %2394 = vmatpush1.bf16.msra.mxu0 %v2374
        %2395 = vmatprep.subr.bf16.mxu0 0
        %2396 = vmatpush1.bf16.msra.mxu0 %v2375
        %2397 = vmatprep.subr.bf16.mxu0 0
        %2398 = vmatpush1.bf16.msra.mxu0 %v2376
        %2399 = vmatprep.subr.bf16.mxu0 0
        %2400 = vmatpush1.bf16.msra.mxu0 %v2377
        %2401 = vmatprep.subr.bf16.mxu0 0
        %2402 = vmatpush1.bf16.msra.mxu0 %v2378
        %2403 = vmatprep.subr.bf16.mxu0 0
        %2404 = vmatpush1.bf16.msra.mxu0 0
        %2405 = vmatprep.subr.bf16.mxu0 0
        %2406 = vmatpush1.bf16.msra.mxu0 0
        %2407 = vmatprep.subr.bf16.mxu0 0
        %2408 = vmatpush1.bf16.msra.mxu0 0
        %2409 = vmatprep.subr.bf16.mxu0 0
        %2410 = vmatpush1.bf16.msra.mxu0 0
        %2411 = vmatprep.subr.bf16.mxu0 0
        %2412 = vmatpush1.bf16.msra.mxu0 0
        %2413 = vmatprep.subr.bf16.mxu0 0
        %2414 = vmatpush1.bf16.msra.mxu0 0
        %2415 = vmatprep.subr.bf16.mxu0 0
        %2416 = vmatpush1.bf16.msra.mxu0 0
        %2417 = vmatprep.subr.bf16.mxu0 0
        %2418 = vmatpush1.bf16.msra.mxu0 0
        %2419 = vmatprep.mubr.bf16.mxu0 0
        %2420 = vmatmul.mubr.bf16.gmra.mrb[0].mxu0 %v2315
        %v2421 = vpop.f32.mrb[0].mxu0
        %v2422 = vadd.f32 %v2337, %v2421
        %v2423 = vpop.f32.mrb[0].mxu0
        %v2424 = vpop.f32.mrb[0].mxu0
        %v2425 = vpop.f32.mrb[0].mxu0
        %2426 = vdwg.mxu0
        %v2427 = vadd.f32 %v957, %v2422
        %2428 = vadd.xlane.f32.xlu0 %v2427
        %v2429 = vpop.xlane.xlu0 %2428
        %v2430 = vrcp.pop 128.0
        %v2431 = vmul.f32 %v2429, %v2430
        %v2432 = vsub.f32 %v2427, %v2431
        %v2433 = vmul.f32 %v2432, %v2432
        %2434 = vadd.xlane.f32.xlu0 %v2433
        %v2435 = vpop.xlane.xlu0 %2434
        %v2436 = vmul.f32 %v2435, %v2430
        %v2437 = vadd.f32 %v2436, 1e-05
        %v2438 = vrsqrt.pop %v2437
        %v2439 = vmul.f32 %v2432, %v2438
        %v2440 = vld [vmem:[%s933] sm:$0x1]
        %v2442 = vlaneseq
        %v2443 = vshrl.u32 %v2442, 7
        %v2444 = vsub.s32 0, %v2443
        %v2445 = vrot.slane %v2440, %v2444
        %v2447 = vmul.f32 %v2439, %v2445
        %v2448 = vld [vmem:[%s936] sm:$0x1]
        %v2450 = vlaneseq
        %v2451 = vshrl.u32 %v2450, 7
        %v2452 = vsub.s32 0, %v2451
        %v2453 = vrot.slane %v2448, %v2452
        %v2455 = vadd.f32 %v2447, %v2453
        %v2456 = vpack.c.bf16 %v2455, %v2455
        %v2457 = vld [vmem:[%s798] sm:$0xff]
        %v2458 = vld [vmem:[%s798 + $0x8] sm:$0xff]
        %v2459 = vld [vmem:[%s798 + $0x10] sm:$0xff]
        %v2460 = vld [vmem:[%s798 + $0x18] sm:$0xff]
        %v2461 = vld [vmem:[%s798 + $0x20] sm:$0xff]
        %v2462 = vld [vmem:[%s798 + $0x28] sm:$0xff]
        %v2463 = vld [vmem:[%s798 + $0x30] sm:$0xff]
        %v2464 = vld [vmem:[%s798 + $0x38] sm:$0xff]
        %v2465 = vld [vmem:[%s798 + $0x40] sm:$0xff]
        %v2466 = vld [vmem:[%s798 + $0x48] sm:$0xff]
        %v2467 = vld [vmem:[%s798 + $0x50] sm:$0xff]
        %v2468 = vld [vmem:[%s798 + $0x58] sm:$0xff]
        %v2469 = vld [vmem:[%s798 + $0x60] sm:$0xff]
        %v2470 = vld [vmem:[%s798 + $0x68] sm:$0xff]
        %v2471 = vld [vmem:[%s798 + $0x70] sm:$0xff]
        %v2472 = vld [vmem:[%s798 + $0x78] sm:$0xff]
        %v2473 = vld [vmem:[%s940] sm:$0x3]
        %v2475 = vlaneseq
        %v2476 = vshrl.u32 %v2475, 7
        %v2477 = vsub.s32 0, %v2476
        %v2478 = vrot.slane %v2473, %v2477
        %v2479 = vlaneseq
        %v2480 = vshrl.u32 %v2479, 7
        %v2481 = vsub.s32 1, %v2480
        %v2482 = vrot.slane %v2473, %v2481
        %v2501 = vunpack.c.l.b16 %v2457
        %v2502 = vunpack.c.h.b16 %v2457
        %v2503 = vunpack.c.l.b16 %v2458
        %v2504 = vunpack.c.h.b16 %v2458
        %v2505 = vunpack.c.l.b16 %v2459
        %v2506 = vunpack.c.h.b16 %v2459
        %v2507 = vunpack.c.l.b16 %v2460
        %v2508 = vunpack.c.h.b16 %v2460
        %v2509 = vunpack.c.l.b16 %v2461
        %v2510 = vunpack.c.h.b16 %v2461
        %v2511 = vunpack.c.l.b16 %v2462
        %v2512 = vunpack.c.h.b16 %v2462
        %v2513 = vunpack.c.l.b16 %v2463
        %v2514 = vunpack.c.h.b16 %v2463
        %v2515 = vunpack.c.l.b16 %v2464
        %v2516 = vunpack.c.h.b16 %v2464
        %v2517 = vunpack.c.l.b16 %v2465
        %v2518 = vunpack.c.h.b16 %v2465
        %v2519 = vunpack.c.l.b16 %v2466
        %v2520 = vunpack.c.h.b16 %v2466
        %v2521 = vunpack.c.l.b16 %v2467
        %v2522 = vunpack.c.h.b16 %v2467
        %v2523 = vunpack.c.l.b16 %v2468
        %v2524 = vunpack.c.h.b16 %v2468
        %v2525 = vunpack.c.l.b16 %v2469
        %v2526 = vunpack.c.h.b16 %v2469
        %v2527 = vunpack.c.l.b16 %v2470
        %v2528 = vunpack.c.h.b16 %v2470
        %v2529 = vunpack.c.l.b16 %v2471
        %v2530 = vunpack.c.h.b16 %v2471
        %v2531 = vunpack.c.l.b16 %v2472
        %v2532 = vunpack.c.h.b16 %v2472
        %v2533 = vpack.c.b16 %v2503, %v2501
        %v2534 = vpack.c.b16 %v2504, %v2502
        %v2535 = vpack.c.b16 %v2507, %v2505
        %v2536 = vpack.c.b16 %v2508, %v2506
        %v2537 = vpack.c.b16 %v2511, %v2509
        %v2538 = vpack.c.b16 %v2512, %v2510
        %v2539 = vpack.c.b16 %v2515, %v2513
        %v2540 = vpack.c.b16 %v2516, %v2514
        %v2541 = vpack.c.b16 %v2519, %v2517
        %v2542 = vpack.c.b16 %v2520, %v2518
        %v2543 = vpack.c.b16 %v2523, %v2521
        %v2544 = vpack.c.b16 %v2524, %v2522
        %v2545 = vpack.c.b16 %v2527, %v2525
        %v2546 = vpack.c.b16 %v2528, %v2526
        %v2547 = vpack.c.b16 %v2531, %v2529
        %v2548 = vpack.c.b16 %v2532, %v2530
        %2565 = vmatprep.subr.bf16.mxu0 %v2534
        %2566 = vmatpush1.bf16.msra.mxu0 %v2533
        %2567 = vmatprep.subr.bf16.mxu0 %v2536
        %2568 = vmatpush1.bf16.msra.mxu0 %v2535
        %2569 = vmatprep.subr.bf16.mxu0 %v2538
        %2570 = vmatpush1.bf16.msra.mxu0 %v2537
        %2571 = vmatprep.subr.bf16.mxu0 %v2540
        %2572 = vmatpush1.bf16.msra.mxu0 %v2539
        %2573 = vmatprep.subr.bf16.mxu0 %v2542
        %2574 = vmatpush1.bf16.msra.mxu0 %v2541
        %2575 = vmatprep.subr.bf16.mxu0 %v2544
        %2576 = vmatpush1.bf16.msra.mxu0 %v2543
        %2577 = vmatprep.subr.bf16.mxu0 %v2546
        %2578 = vmatpush1.bf16.msra.mxu0 %v2545
        %2579 = vmatprep.subr.bf16.mxu0 %v2548
        %2580 = vmatpush1.bf16.msra.mxu0 %v2547
        %2581 = vmatprep.subr.bf16.mxu0 0
        %2582 = vmatpush1.bf16.msra.mxu0 0
        %2583 = vmatprep.subr.bf16.mxu0 0
        %2584 = vmatpush1.bf16.msra.mxu0 0
        %2585 = vmatprep.subr.bf16.mxu0 0
        %2586 = vmatpush1.bf16.msra.mxu0 0
        %2587 = vmatprep.subr.bf16.mxu0 0
        %2588 = vmatpush1.bf16.msra.mxu0 0
        %2589 = vmatprep.subr.bf16.mxu0 0
        %2590 = vmatpush1.bf16.msra.mxu0 0
        %2591 = vmatprep.subr.bf16.mxu0 0
        %2592 = vmatpush1.bf16.msra.mxu0 0
        %2593 = vmatprep.subr.bf16.mxu0 0
        %2594 = vmatpush1.bf16.msra.mxu0 0
        %2595 = vmatprep.subr.bf16.mxu0 0
        %2596 = vmatpush1.bf16.msra.mxu0 0
        %2597 = vmatprep.mubr.bf16.mxu0 0
        %2598 = vmatmul.mubr.bf16.gmra.mrb[0].mxu0 %v2456
        %v2599 = vpop.f32.mrb[0].mxu0
        %v2600 = vadd.f32 %v2478, %v2599
        %v2601 = vpop.f32.mrb[0].mxu0
        %v2602 = vadd.f32 %v2482, %v2601
        %v2603 = vpop.f32.mrb[0].mxu0
        %v2604 = vpop.f32.mrb[0].mxu0
        %2605 = vdwg.mxu0
        %v2606 = vmax.f32 %v2600, 0.0
        %v2607 = vmax.f32 %v2602, 0.0
        %v2608 = vpack.c.bf16 %v2606, %v2606
        %v2609 = vpack.c.bf16 %v2607, %v2607
        %v2610 = vld [vmem:[%s807] sm:$0xf]
        %v2611 = vld [vmem:[%s807 + $0x4] sm:$0xf]
        %v2612 = vld [vmem:[%s807 + $0x8] sm:$0xf]
        %v2613 = vld [vmem:[%s807 + $0xc] sm:$0xf]
        %v2614 = vld [vmem:[%s807 + $0x10] sm:$0xf]
        %v2615 = vld [vmem:[%s807 + $0x14] sm:$0xf]
        %v2616 = vld [vmem:[%s807 + $0x18] sm:$0xf]
        %v2617 = vld [vmem:[%s807 + $0x1c] sm:$0xf]
        %v2618 = vld [vmem:[%s807 + $0x20] sm:$0xf]
        %v2619 = vld [vmem:[%s807 + $0x24] sm:$0xf]
        %v2620 = vld [vmem:[%s807 + $0x28] sm:$0xf]
        %v2621 = vld [vmem:[%s807 + $0x2c] sm:$0xf]
        %v2622 = vld [vmem:[%s807 + $0x30] sm:$0xf]
        %v2623 = vld [vmem:[%s807 + $0x34] sm:$0xf]
        %v2624 = vld [vmem:[%s807 + $0x38] sm:$0xf]
        %v2625 = vld [vmem:[%s807 + $0x3c] sm:$0xf]
        %v2626 = vld [vmem:[%s807 + $0x40] sm:$0xf]
        %v2627 = vld [vmem:[%s807 + $0x44] sm:$0xf]
        %v2628 = vld [vmem:[%s807 + $0x48] sm:$0xf]
        %v2629 = vld [vmem:[%s807 + $0x4c] sm:$0xf]
        %v2630 = vld [vmem:[%s807 + $0x50] sm:$0xf]
        %v2631 = vld [vmem:[%s807 + $0x54] sm:$0xf]
        %v2632 = vld [vmem:[%s807 + $0x58] sm:$0xf]
        %v2633 = vld [vmem:[%s807 + $0x5c] sm:$0xf]
        %v2634 = vld [vmem:[%s807 + $0x60] sm:$0xf]
        %v2635 = vld [vmem:[%s807 + $0x64] sm:$0xf]
        %v2636 = vld [vmem:[%s807 + $0x68] sm:$0xf]
        %v2637 = vld [vmem:[%s807 + $0x6c] sm:$0xf]
        %v2638 = vld [vmem:[%s807 + $0x70] sm:$0xf]
        %v2639 = vld [vmem:[%s807 + $0x74] sm:$0xf]
        %v2640 = vld [vmem:[%s807 + $0x78] sm:$0xf]
        %v2641 = vld [vmem:[%s807 + $0x7c] sm:$0xf]
        %v2642 = vld [vmem:[%s943] sm:$0x1]
        %v2644 = vlaneseq
        %v2645 = vshrl.u32 %v2644, 7
        %v2646 = vsub.s32 0, %v2645
        %v2647 = vrot.slane %v2642, %v2646
        %v2681 = vunpack.c.l.b16 %v2610
        %v2682 = vunpack.c.l.b16 %v2611
        %v2683 = vunpack.c.l.b16 %v2612
        %v2684 = vunpack.c.l.b16 %v2613
        %v2685 = vunpack.c.l.b16 %v2614
        %v2686 = vunpack.c.l.b16 %v2615
        %v2687 = vunpack.c.l.b16 %v2616
        %v2688 = vunpack.c.l.b16 %v2617
        %v2689 = vunpack.c.l.b16 %v2618
        %v2690 = vunpack.c.l.b16 %v2619
        %v2691 = vunpack.c.l.b16 %v2620
        %v2692 = vunpack.c.l.b16 %v2621
        %v2693 = vunpack.c.l.b16 %v2622
        %v2694 = vunpack.c.l.b16 %v2623
        %v2695 = vunpack.c.l.b16 %v2624
        %v2696 = vunpack.c.l.b16 %v2625
        %v2697 = vunpack.c.l.b16 %v2626
        %v2698 = vunpack.c.l.b16 %v2627
        %v2699 = vunpack.c.l.b16 %v2628
        %v2700 = vunpack.c.l.b16 %v2629
        %v2701 = vunpack.c.l.b16 %v2630
        %v2702 = vunpack.c.l.b16 %v2631
        %v2703 = vunpack.c.l.b16 %v2632
        %v2704 = vunpack.c.l.b16 %v2633
        %v2705 = vunpack.c.l.b16 %v2634
        %v2706 = vunpack.c.l.b16 %v2635
        %v2707 = vunpack.c.l.b16 %v2636
        %v2708 = vunpack.c.l.b16 %v2637
        %v2709 = vunpack.c.l.b16 %v2638
        %v2710 = vunpack.c.l.b16 %v2639
        %v2711 = vunpack.c.l.b16 %v2640
        %v2712 = vunpack.c.l.b16 %v2641
        %v2713 = vpack.c.b16 %v2682, %v2681
        %v2714 = vpack.c.b16 %v2684, %v2683
        %v2715 = vpack.c.b16 %v2686, %v2685
        %v2716 = vpack.c.b16 %v2688, %v2687
        %v2717 = vpack.c.b16 %v2690, %v2689
        %v2718 = vpack.c.b16 %v2692, %v2691
        %v2719 = vpack.c.b16 %v2694, %v2693
        %v2720 = vpack.c.b16 %v2696, %v2695
        %v2721 = vpack.c.b16 %v2698, %v2697
        %v2722 = vpack.c.b16 %v2700, %v2699
        %v2723 = vpack.c.b16 %v2702, %v2701
        %v2724 = vpack.c.b16 %v2704, %v2703
        %v2725 = vpack.c.b16 %v2706, %v2705
        %v2726 = vpack.c.b16 %v2708, %v2707
        %v2727 = vpack.c.b16 %v2710, %v2709
        %v2728 = vpack.c.b16 %v2712, %v2711
        %2745 = vmatprep.subr.bf16.mxu0 0
        %2746 = vmatpush1.bf16.msra.mxu0 %v2713
        %2747 = vmatprep.subr.bf16.mxu0 0
        %2748 = vmatpush1.bf16.msra.mxu0 %v2714
        %2749 = vmatprep.subr.bf16.mxu0 0
        %2750 = vmatpush1.bf16.msra.mxu0 %v2715
        %2751 = vmatprep.subr.bf16.mxu0 0
        %2752 = vmatpush1.bf16.msra.mxu0 %v2716
        %2753 = vmatprep.subr.bf16.mxu0 0
        %2754 = vmatpush1.bf16.msra.mxu0 %v2717
        %2755 = vmatprep.subr.bf16.mxu0 0
        %2756 = vmatpush1.bf16.msra.mxu0 %v2718
        %2757 = vmatprep.subr.bf16.mxu0 0
        %2758 = vmatpush1.bf16.msra.mxu0 %v2719
        %2759 = vmatprep.subr.bf16.mxu0 0
        %2760 = vmatpush1.bf16.msra.mxu0 %v2720
        %2761 = vmatprep.subr.bf16.mxu0 0
        %2762 = vmatpush1.bf16.msra.mxu0 %v2721
        %2763 = vmatprep.subr.bf16.mxu0 0
        %2764 = vmatpush1.bf16.msra.mxu0 %v2722
        %2765 = vmatprep.subr.bf16.mxu0 0
        %2766 = vmatpush1.bf16.msra.mxu0 %v2723
        %2767 = vmatprep.subr.bf16.mxu0 0
        %2768 = vmatpush1.bf16.msra.mxu0 %v2724
        %2769 = vmatprep.subr.bf16.mxu0 0
        %2770 = vmatpush1.bf16.msra.mxu0 %v2725
        %2771 = vmatprep.subr.bf16.mxu0 0
        %2772 = vmatpush1.bf16.msra.mxu0 %v2726
        %2773 = vmatprep.subr.bf16.mxu0 0
        %2774 = vmatpush1.bf16.msra.mxu0 %v2727
        %2775 = vmatprep.subr.bf16.mxu0 0
        %2776 = vmatpush1.bf16.msra.mxu0 %v2728
        %2777 = vmatprep.mubr.bf16.mxu0 %v2609
        %2778 = vmatmul.mubr.bf16.gmra.mrb[0].mxu0 %v2608
        %v2779 = vpop.f32.mrb[0].mxu0
        %v2780 = vadd.f32 %v2647, %v2779
        %v2781 = vpop.f32.mrb[0].mxu0
        %v2782 = vpop.f32.mrb[0].mxu0
        %v2783 = vpop.f32.mrb[0].mxu0
        %2784 = vdwg.mxu0
        %v2785 = vadd.f32 %v2455, %v2780
        %2786 = vadd.xlane.f32.xlu0 %v2785
        %v2787 = vpop.xlane.xlu0 %2786
        %v2788 = vmul.f32 %v2787, %v2430
        %v2789 = vsub.f32 %v2785, %v2788
        %v2790 = vmul.f32 %v2789, %v2789
        %2791 = vadd.xlane.f32.xlu0 %v2790
        %v2792 = vpop.xlane.xlu0 %2791
        %v2793 = vmul.f32 %v2792, %v2430
        %v2794 = vadd.f32 %v2793, 1e-05
        %v2795 = vrsqrt.pop %v2794
        %v2796 = vmul.f32 %v2789, %v2795
        %v2797 = vld [vmem:[%s946] sm:$0x1]
        %v2799 = vlaneseq
        %v2800 = vshrl.u32 %v2799, 7
        %v2801 = vsub.s32 0, %v2800
        %v2802 = vrot.slane %v2797, %v2801
        %v2804 = vmul.f32 %v2796, %v2802
        %v2805 = vld [vmem:[%s949] sm:$0x1]
        %v2807 = vlaneseq
        %v2808 = vshrl.u32 %v2807, 7
        %v2809 = vsub.s32 0, %v2808
        %v2810 = vrot.slane %v2805, %v2809
        %v2812 = vadd.f32 %v2804, %v2810
        %2813 = vst [vmem:[#allocation2] sm:$0xff] %v2812
        %p2814 = scmp.eq.s32.totalorder %s48, 1
        // Predicated region
        $region121: #{tpu_custom_call.1} parent=87 // pred_check
          %p2815 = pneg %p2814
        $region122: #{tpu_custom_call.1} parent=87 // pred_check_branch
          %2817 = sbr.rel (%p2815) target = $region124
        $region123: #{tpu_custom_call.1} parent=87 // pred_region
          %2818 = vst [vmem:[%s918] sm:$0xff] %v2812
        $region124: #{tpu_custom_call.1} parent=87 // pred_fallthru
          _
        %s2819 = sand.u32 %s505, 1
        %s2820 = scalar_lea.sflag [#allocation5], %s2819
        %s2821 = sand.u32 %s505, 1
        %s2822 = smul.addr %s2821, 8
        %s2823 = scalar_lea.vmem [#allocation15], %s2822
        // Predicated region
        $region125: #{tpu_custom_call.1} parent=87 // pred_check
          %p2824 = pneg %p515
        $region126: #{tpu_custom_call.1} parent=87 // pred_check_branch
          %2826 = sbr.rel (%p2824) target = $region128
        $region127: #{tpu_custom_call.1} parent=87 // pred_region
          %s2828 = ssub.s32 128, 128
          %2829 = vsyncadd %s2820, %s2828
          %s2830 = smul.addr %s47, 128
          %s2831 = scalar_lea.hbm %s17, %s2830
          %s2833 = sshll.u32 %s2823, 4
          %s2834 = int_to_ptr.vmem [resolvable:$true] %s2833
          %2836 = dma.vmem_to_hbm [thread:$0]  %s2834, 128, %s2831, %s2820
        $region128: #{tpu_custom_call.1} parent=87 // pred_fallthru
          _
      $region88: #{tpu_custom_call.1} parent=5 // pred_fallthru
        _
      %p2837 = scmp.le.s32.totalorder 2, %s38
      // Predicated region
      $region129: #{tpu_custom_call.1} parent=5 // pred_check
        %p2838 = pneg %p2837
      $region130: #{tpu_custom_call.1} parent=5 // pred_check_branch
        %2840 = sbr.rel (%p2838) target = $region132
      $region131: #{tpu_custom_call.1} parent=5 // pred_region
        %s2841 = ssub.s32 %s38, 2
        // Predicated region
        $region133: #{tpu_custom_call.1} parent=131 // pred_check
          %p2842 = pneg %p521
        $region134: #{tpu_custom_call.1} parent=131 // pred_check_branch
          %2844 = sbr.rel (%p2842) target = $region136
        $region135: #{tpu_custom_call.1} parent=131 // pred_region
          %s2845 = sand.u32 %s506, 1
          %s2846 = scalar_lea.sflag [#allocation5], %s2845
          %s2847 = sand.u32 %s506, 1
          %s2848 = smul.addr %s2847, 8
          %s2849 = scalar_lea.vmem [#allocation15], %s2848
          %2850 = dma.done %s2846, 128
        $region136: #{tpu_custom_call.1} parent=131 // pred_fallthru
          _
      $region132: #{tpu_custom_call.1} parent=5 // pred_fallthru
        _
    $region6: #{tpu_custom_call.1} parent=1 // loop_footer
      %s42 = sadd.s32 1, %s38
    $region7: #{tpu_custom_call.1} parent=1 // loop_footer_branch
      %37 = sbr.rel target = $region3
    $region8: #{tpu_custom_call.1} parent=1 // loop_exit
      _
    %2851 = vsyncpa [#allocation4], 1
    %s2852 = scalar_lea.sflag [#allocation4], 1
    %2853 = vsyncpa %s2852, 1
    %2854 = vsyncpa [#allocation7], 1
    %s2855 = scalar_lea.sflag [#allocation7], 1
    %2856 = vsyncpa %s2855, 1
    %2857 = vsyncpa [#allocation10], 1
    %s2858 = scalar_lea.sflag [#allocation10], 1
    %2859 = vsyncpa %s2858, 1
    %2860 = vsyncpa [#allocation13], 1
    %s2861 = scalar_lea.sflag [#allocation13], 1
    %2862 = vsyncpa %s2861, 1
    %2863 = vsyncpa [#allocation5], 1
    %s2864 = scalar_lea.sflag [#allocation5], 1
    %2865 = vsyncpa %s2864, 1

</llo_original>
